<compile_context>
chip_gen: v7x
topology: tpu7x:2x2x1
jax: 0.10.0
libtpu: 0.0.40
codegen_flags: <defaults>
</compile_context>

<pallas_src>
import functools

import jax
import jax.numpy as jnp
import numpy as np
from jax import lax
from jax.experimental import pallas as pl
from jax.experimental.pallas import tpu as pltpu


def self_attention_kernel(x_ref, xq_ref, wqT_ref, bq_ref, wk_ref, bk_ref,
                          wv_ref, bv_ref, o_ref, *, compute_dtype):
    # x_ref : (1, N, C)   pixel-major activations for the current batch element
    # xq_ref: (1, TQ, C)  query-pixel tile of the same activations
    # o_ref : (1, C, TQ)  channel-major output tile (lane dim = pixels -> dense stores)
    N = x_ref.shape[1]

    x_all = x_ref[0]                                   # (N, C)
    x_q = xq_ref[0]                                    # (TQ, C)

    trans_b = (((1,), (1,)), ((), ()))                 # contract last dims: A @ B.T

    # 1x1 convolutions.  Q in pixel-major (rows = query pixels); K/V channel-major
    # (lanes = pixels) so the attention-output matmul directly yields the
    # lane-dense (C, TQ) tile that is stored.
    q = jnp.dot(x_q, wqT_ref[...],
                preferred_element_type=jnp.float32) + bq_ref[...]          # (TQ, C)
    k = lax.dot_general(wk_ref[...], x_all, trans_b,
                        preferred_element_type=jnp.float32) + bk_ref[...]  # (C, N)
    v = lax.dot_general(wv_ref[...], x_all, trans_b,
                        preferred_element_type=jnp.float32) + bv_ref[...]  # (C, N)

    # scores[i, j] = sum_c Q[c, i0+i] * K[c, j]
    s = jnp.dot(q.astype(compute_dtype), k.astype(compute_dtype),
                preferred_element_type=jnp.float32)                        # (TQ, N)

    # Softmax over j with the normalization folded into the output scaling.
    m = jnp.max(s, axis=-1, keepdims=True)                                 # (TQ, 1)
    p = jnp.exp(s - m)                                                     # (TQ, N), unnormalized

    # Row sums as a (1, TQ) lane-major row (matches the output layout) via a
    # ones-matvec on the otherwise idle MXU; avoids any vector transpose and any
    # extra normalization pass over the (TQ, N) block.
    ones_row = jnp.ones((1, N), jnp.float32)
    l_row = lax.dot_general(ones_row, p, trans_b,
                            preferred_element_type=jnp.float32)            # (1, TQ)
    inv_l = pl.reciprocal(l_row, approx=True)                              # EUP slot
    inv_l = inv_l * (2.0 - l_row * inv_l)                                  # one Newton step

    # out[c, i] = (sum_j V[c, j] * p[i, j]) / l[i]
    out = lax.dot_general(v.astype(compute_dtype), p.astype(compute_dtype),
                          trans_b, preferred_element_type=jnp.float32)     # (C, TQ)
    o_ref[0] = (out * inv_l).astype(o_ref.dtype)


def self_attention_pallas(x_nchw, wq, bq, wk, bk, wv, bv, *, tq=256,
                          compute_dtype=jnp.bfloat16):
    """x_nchw: (B, C, H, W) float32.  w*: (C, C) [out, in].  b*: (C,)."""
    B, C, H, W = x_nchw.shape
    N = H * W
    # Query-tile size: use the requested tile if it divides N, else one tile.
    TQ = tq if (N % tq == 0) else N
    # TODO(synk): for very large N, switch to a KV-tiled online-softmax variant
    # so the (TQ, N) score block never exceeds VMEM.

    # NCHW -> (B, N, C) pixel-major (n = h*W + w, matching torch .view(B, C, H*W)).
    x_nc = jnp.transpose(x_nchw.reshape(B, C, N), (0, 2, 1))

    wq_t = wq.T                                        # (C_in, C_out): q = x @ Wq^T + bq
    bq_row = bq.reshape(1, C)                          # row bias for pixel-major Q
    bk_col = bk.reshape(C, 1)                          # column biases for channel-major K/V
    bv_col = bv.reshape(C, 1)

    kernel = functools.partial(self_attention_kernel, compute_dtype=compute_dtype)
    full = lambda r, c: pl.BlockSpec((r, c), lambda b, qi: (0, 0))

    out_cn = pl.pallas_call(
        kernel,
        out_shape=jax.ShapeDtypeStruct((B, C, N), jnp.float32),
        grid_spec=pltpu.PrefetchScalarGridSpec(
            num_scalar_prefetch=0,
            grid=(B, N // TQ),
            in_specs=[
                pl.BlockSpec((1, N, C), lambda b, qi: (b, 0, 0)),    # x (full, for K/V)
                pl.BlockSpec((1, TQ, C), lambda b, qi: (b, qi, 0)),  # x query tile (for Q)
                full(C, C), full(1, C),                              # Wq^T, bq (row)
                full(C, C), full(C, 1),                              # Wk,   bk (col)
                full(C, C), full(C, 1),                              # Wv,   bv (col)
            ],
            out_specs=pl.BlockSpec((1, C, TQ), lambda b, qi: (b, 0, qi)),
        ),
        compiler_params=pltpu.CompilerParams(
            dimension_semantics=("parallel", "parallel")),
    )(x_nc, x_nc, wq_t, bq_row, wk, bk_col, wv, bv_col)

    # (B, C, N) -> (B, C, H, W): pure reshape, no transpose.
    return out_cn.reshape(B, C, H, W)


def self_attention_ref(x, wq, bq, wk, bk, wv, bv):
    """Pure-JAX reference mirroring the PyTorch forward exactly."""
    B, C, H, W = x.shape
    conv1x1 = lambda x, w, b: (jnp.einsum('bchw,oc->bohw', x, w)
                               + b[None, :, None, None])
    q = conv1x1(x, wq, bq).reshape(B, C, -1)
    k = conv1x1(x, wk, bk).reshape(B, C, -1)
    v = conv1x1(x, wv, bv).reshape(B, C, -1)
    scores = jnp.einsum('bci,bcj->bij', q, k)
    attn = jax.nn.softmax(scores, axis=-1)
    out = jnp.einsum('bcj,bij->bci', v, attn)
    return out.reshape(B, C, H, W)


if __name__ == "__main__":
    B, C, H, W = 2, 4, 16, 16

    key = jax.random.PRNGKey(0)
    kx, kq, kbq, kk, kbk, kv, kbv = jax.random.split(key, 7)

    bound = 1.0 / np.sqrt(C)  # matches nn.Conv2d default init scale
    x = jax.random.normal(kx, (B, C, H, W), dtype=jnp.float32)
    wq = jax.random.uniform(kq, (C, C), jnp.float32, -bound, bound)
    bq = jax.random.uniform(kbq, (C,), jnp.float32, -bound, bound)
    wk = jax.random.uniform(kk, (C, C), jnp.float32, -bound, bound)
    bk = jax.random.uniform(kbk, (C,), jnp.float32, -bound, bound)
    wv = jax.random.uniform(kv, (C, C), jnp.float32, -bound, bound)
    bv = jax.random.uniform(kbv, (C,), jnp.float32, -bound, bound)

    ref = jax.block_until_ready(self_attention_ref(x, wq, bq, wk, bk, wv, bv))

    # 1) f32 compute path: tight semantic check against the reference.
    out_f32 = jax.block_until_ready(
        self_attention_pallas(x, wq, bq, wk, bk, wv, bv,
                              compute_dtype=jnp.float32))
    assert out_f32.shape == (B, C, H, W)
    np.testing.assert_allclose(np.asarray(out_f32), np.asarray(ref),
                               rtol=1e-4, atol=1e-4)

    # 2) default bf16-MXU path (perf configuration): relaxed tolerance per bf16 operands.
    out_bf16 = jax.block_until_ready(
        self_attention_pallas(x, wq, bq, wk, bk, wv, bv))
    assert out_bf16.shape == (B, C, H, W)
    np.testing.assert_allclose(np.asarray(out_bf16), np.asarray(ref),
                               rtol=2e-2, atol=2e-2)

    # 3) multi-tile path (TQ < N) to exercise the query-tiled grid.
    out_tiled = jax.block_until_ready(
        self_attention_pallas(x, wq, bq, wk, bk, wv, bv, tq=128,
                              compute_dtype=jnp.float32))
    np.testing.assert_allclose(np.asarray(out_tiled), np.asarray(ref),
                               rtol=1e-4, atol=1e-4)

    print("KERNEL_OK")
</pallas_src>

<mosaic_0001>
module attributes {stable_mosaic.version = 11 : i64} {
  func.func @self_attention_kernel(%arg0: i32, %arg1: i32, %arg2: memref<1x256x4xf32, #tpu.memory_space<vmem>>, %arg3: memref<1x256x4xf32, #tpu.memory_space<vmem>>, %arg4: memref<4x4xf32, #tpu.memory_space<vmem>>, %arg5: memref<1x4xf32, #tpu.memory_space<vmem>>, %arg6: memref<4x4xf32, #tpu.memory_space<vmem>>, %arg7: memref<4x1xf32, #tpu.memory_space<vmem>>, %arg8: memref<4x4xf32, #tpu.memory_space<vmem>>, %arg9: memref<4x1xf32, #tpu.memory_space<vmem>>, %arg10: memref<1x4x256xf32, #tpu.memory_space<vmem>>) attributes {dimension_semantics = [#tpu.dimension_semantics<parallel>, #tpu.dimension_semantics<parallel>], iteration_bounds = array<i64: 2, 1>, scalar_prefetch = 0 : i64, scratch_operands = 0 : i64, tpu.core_type = #tpu.core_type<tc>, window_params = [{transform_indices = @transform_0, window_bounds = array<i64: 1, 256, 4>}, {transform_indices = @transform_1, window_bounds = array<i64: 1, 256, 4>}, {pipeline_mode = #tpu.pipeline_mode<synchronous>, transform_indices = @transform_2, window_bounds = array<i64: 4, 4>}, {pipeline_mode = #tpu.pipeline_mode<synchronous>, transform_indices = @transform_3, window_bounds = array<i64: 1, 4>}, {pipeline_mode = #tpu.pipeline_mode<synchronous>, transform_indices = @transform_4, window_bounds = array<i64: 4, 4>}, {pipeline_mode = #tpu.pipeline_mode<synchronous>, transform_indices = @transform_5, window_bounds = array<i64: 4, 1>}, {pipeline_mode = #tpu.pipeline_mode<synchronous>, transform_indices = @transform_6, window_bounds = array<i64: 4, 4>}, {pipeline_mode = #tpu.pipeline_mode<synchronous>, transform_indices = @transform_7, window_bounds = array<i64: 4, 1>}, {transform_indices = @transform_8, window_bounds = array<i64: 1, 4, 256>}]} {
    %c0 = arith.constant 0 : index
    %c0_0 = arith.constant 0 : index
    %c0_1 = arith.constant 0 : index
    %0 = vector.load %arg2[%c0, %c0_0, %c0_1] : memref<1x256x4xf32, #tpu.memory_space<vmem>>, vector<1x256x4xf32>
    %1 = vector.shape_cast %0 : vector<1x256x4xf32> to vector<256x4xf32>
    %c0_2 = arith.constant 0 : index
    %c0_3 = arith.constant 0 : index
    %c0_4 = arith.constant 0 : index
    %2 = vector.load %arg3[%c0_2, %c0_3, %c0_4] : memref<1x256x4xf32, #tpu.memory_space<vmem>>, vector<1x256x4xf32>
    %3 = vector.shape_cast %2 : vector<1x256x4xf32> to vector<256x4xf32>
    %c0_5 = arith.constant 0 : index
    %c0_6 = arith.constant 0 : index
    %4 = vector.load %arg4[%c0_5, %c0_6] : memref<4x4xf32, #tpu.memory_space<vmem>>, vector<4x4xf32>
    %cst = arith.constant dense<0.000000e+00> : vector<256x4xf32>
    %5 = tpu.matmul %3, %4, %cst {dimension_numbers = #tpu.dot_dimension_numbers<[1], [0], [0], [1], [0, 0, 1, 1], [], []>} : vector<256x4xf32>, vector<4x4xf32>, vector<256x4xf32> -> vector<256x4xf32>
    %c0_7 = arith.constant 0 : index
    %c0_8 = arith.constant 0 : index
    %6 = vector.load %arg5[%c0_7, %c0_8] : memref<1x4xf32, #tpu.memory_space<vmem>>, vector<1x4xf32>
    %7 = vector.broadcast %6 : vector<1x4xf32> to vector<256x4xf32>
    %8 = arith.addf %5, %7 : vector<256x4xf32>
    %c0_9 = arith.constant 0 : index
    %c0_10 = arith.constant 0 : index
    %9 = vector.load %arg6[%c0_9, %c0_10] : memref<4x4xf32, #tpu.memory_space<vmem>>, vector<4x4xf32>
    %cst_11 = arith.constant dense<0.000000e+00> : vector<4x256xf32>
    %10 = tpu.matmul %9, %1, %cst_11 {dimension_numbers = #tpu.dot_dimension_numbers<[1], [1], [0], [0], [0, 0, 1, 0], [], []>} : vector<4x4xf32>, vector<256x4xf32>, vector<4x256xf32> -> vector<4x256xf32>
    %c0_12 = arith.constant 0 : index
    %c0_13 = arith.constant 0 : index
    %11 = vector.load %arg7[%c0_12, %c0_13] : memref<4x1xf32, #tpu.memory_space<vmem>>, vector<4x1xf32>
    %12 = vector.broadcast %11 : vector<4x1xf32> to vector<4x256xf32>
    %13 = arith.addf %10, %12 : vector<4x256xf32>
    %c0_14 = arith.constant 0 : index
    %c0_15 = arith.constant 0 : index
    %14 = vector.load %arg8[%c0_14, %c0_15] : memref<4x4xf32, #tpu.memory_space<vmem>>, vector<4x4xf32>
    %cst_16 = arith.constant dense<0.000000e+00> : vector<4x256xf32>
    %15 = tpu.matmul %14, %1, %cst_16 {dimension_numbers = #tpu.dot_dimension_numbers<[1], [1], [0], [0], [0, 0, 1, 0], [], []>} : vector<4x4xf32>, vector<256x4xf32>, vector<4x256xf32> -> vector<4x256xf32>
    %c0_17 = arith.constant 0 : index
    %c0_18 = arith.constant 0 : index
    %16 = vector.load %arg9[%c0_17, %c0_18] : memref<4x1xf32, #tpu.memory_space<vmem>>, vector<4x1xf32>
    %17 = vector.broadcast %16 : vector<4x1xf32> to vector<4x256xf32>
    %18 = arith.addf %15, %17 : vector<4x256xf32>
    %cst_19 = arith.constant dense<0.000000e+00> : vector<256x256xf32>
    %19 = tpu.matmul %8, %13, %cst_19 {dimension_numbers = #tpu.dot_dimension_numbers<[1], [0], [0], [1], [0, 0, 1, 1], [], []>} : vector<256x4xf32>, vector<4x256xf32>, vector<256x256xf32> -> vector<256x256xf32>
    %cst_20 = arith.constant dense<0xFF800000> : vector<256xf32>
    %20 = vector.multi_reduction <maximumf>, %19, %cst_20 [1] : vector<256x256xf32> to vector<256xf32>
    %21 = vector.shape_cast %20 : vector<256xf32> to vector<256x1xf32>
    %22 = vector.broadcast %21 : vector<256x1xf32> to vector<256x256xf32>
    %23 = arith.subf %19, %22 : vector<256x256xf32>
    %24 = math.exp %23 : vector<256x256xf32>
    %cst_21 = arith.constant 1.000000e+00 : f32
    %25 = vector.broadcast %cst_21 : f32 to vector<1x256xf32>
    %cst_22 = arith.constant dense<0.000000e+00> : vector<1x256xf32>
    %26 = tpu.matmul %25, %24, %cst_22 {dimension_numbers = #tpu.dot_dimension_numbers<[1], [1], [0], [0], [0, 0, 1, 0], [], []>} : vector<1x256xf32>, vector<256x256xf32>, vector<1x256xf32> -> vector<1x256xf32>
    %27 = tpu.reciprocal %26 {approx = true} : vector<1x256xf32> -> vector<1x256xf32>
    %28 = arith.mulf %26, %27 : vector<1x256xf32>
    %cst_23 = arith.constant 2.000000e+00 : f32
    %29 = vector.broadcast %cst_23 : f32 to vector<1x256xf32>
    %30 = arith.subf %29, %28 : vector<1x256xf32>
    %31 = arith.mulf %27, %30 : vector<1x256xf32>
    %cst_24 = arith.constant dense<0.000000e+00> : vector<4x256xf32>
    %32 = tpu.matmul %18, %24, %cst_24 {dimension_numbers = #tpu.dot_dimension_numbers<[1], [1], [0], [0], [0, 0, 1, 0], [], []>} : vector<4x256xf32>, vector<256x256xf32>, vector<4x256xf32> -> vector<4x256xf32>
    %33 = vector.broadcast %31 : vector<1x256xf32> to vector<4x256xf32>
    %34 = arith.mulf %32, %33 : vector<4x256xf32>
    %c0_25 = arith.constant 0 : index
    %c0_26 = arith.constant 0 : index
    %c0_27 = arith.constant 0 : index
    %35 = vector.load %arg10[%c0_25, %c0_26, %c0_27] : memref<1x4x256xf32, #tpu.memory_space<vmem>>, vector<1x4x256xf32>
    %36 = vector.shape_cast %35 : vector<1x4x256xf32> to vector<4x256xf32>
    %37 = vector.shape_cast %34 : vector<4x256xf32> to vector<1x4x256xf32>
    tpu.vector_store %arg10[%c0_25, %c0_26, %c0_27], %37 {strides = array<i32>} : memref<1x4x256xf32, #tpu.memory_space<vmem>>, vector<1x4x256xf32>,
    return
  }
  func.func @transform_0(%arg0: i32, %arg1: i32) -> (i32, i32, i32) {
    %c0_i32 = arith.constant 0 : i32
    %c0_i32_0 = arith.constant 0 : i32
    %c0_i32_1 = arith.constant 0 : i32
    return %arg0, %c0_i32, %c0_i32_0 : i32, i32, i32
  }
  func.func @transform_1(%arg0: i32, %arg1: i32) -> (i32, i32, i32) {
    %c0_i32 = arith.constant 0 : i32
    %c0_i32_0 = arith.constant 0 : i32
    return %arg0, %arg1, %c0_i32 : i32, i32, i32
  }
  func.func @transform_2(%arg0: i32, %arg1: i32) -> (i32, i32) {
    %c0_i32 = arith.constant 0 : i32
    %c0_i32_0 = arith.constant 0 : i32
    %c0_i32_1 = arith.constant 0 : i32
    return %c0_i32, %c0_i32_0 : i32, i32
  }
  func.func @transform_3(%arg0: i32, %arg1: i32) -> (i32, i32) {
    %c0_i32 = arith.constant 0 : i32
    %c0_i32_0 = arith.constant 0 : i32
    %c0_i32_1 = arith.constant 0 : i32
    return %c0_i32, %c0_i32_0 : i32, i32
  }
  func.func @transform_4(%arg0: i32, %arg1: i32) -> (i32, i32) {
    %c0_i32 = arith.constant 0 : i32
    %c0_i32_0 = arith.constant 0 : i32
    %c0_i32_1 = arith.constant 0 : i32
    return %c0_i32, %c0_i32_0 : i32, i32
  }
  func.func @transform_5(%arg0: i32, %arg1: i32) -> (i32, i32) {
    %c0_i32 = arith.constant 0 : i32
    %c0_i32_0 = arith.constant 0 : i32
    %c0_i32_1 = arith.constant 0 : i32
    return %c0_i32, %c0_i32_0 : i32, i32
  }
  func.func @transform_6(%arg0: i32, %arg1: i32) -> (i32, i32) {
    %c0_i32 = arith.constant 0 : i32
    %c0_i32_0 = arith.constant 0 : i32
    %c0_i32_1 = arith.constant 0 : i32
    return %c0_i32, %c0_i32_0 : i32, i32
  }
  func.func @transform_7(%arg0: i32, %arg1: i32) -> (i32, i32) {
    %c0_i32 = arith.constant 0 : i32
    %c0_i32_0 = arith.constant 0 : i32
    %c0_i32_1 = arith.constant 0 : i32
    return %c0_i32, %c0_i32_0 : i32, i32
  }
  func.func @transform_8(%arg0: i32, %arg1: i32) -> (i32, i32, i32) {
    %c0_i32 = arith.constant 0 : i32
    %c0_i32_0 = arith.constant 0 : i32
    return %arg0, %c0_i32, %arg1 : i32, i32, i32
  }
}

</mosaic_0001>

<llo_original>
// kernel: tpu_custom_call.1
$region0: #{tpu_custom_call.1}
  #allocation0 [shape = 'u32[]', space=smem, size = 0x4, offset = 0x4, fixed_abs, tag = 'smem constant byte address 0x4 - core index']
  #allocation1 [shape = 'u32[144,128]{1,0:T(1,128)}', space=vmem, size = 0x12000, scoped, tag = 'internal scratch']
  %s0 = inlined_call_operand.vmem [shape: f32[2,256,4], index: 0, kind: input, shape index: {}]
  %s1 = inlined_call_operand.vmem [shape: f32[2,256,4], index: 1, kind: input, shape index: {}]
  %s2 = inlined_call_operand.vmem [shape: f32[4,4], index: 2, kind: input, shape index: {}]
  %s3 = inlined_call_operand.vmem [shape: f32[1,4], index: 3, kind: input, shape index: {}]
  %s4 = inlined_call_operand.vmem [shape: f32[4,4], index: 4, kind: input, shape index: {}]
  %s5 = inlined_call_operand.vmem [shape: f32[4,1], index: 5, kind: input, shape index: {}]
  %s6 = inlined_call_operand.vmem [shape: f32[4,4], index: 6, kind: input, shape index: {}]
  %s7 = inlined_call_operand.vmem [shape: f32[4,1], index: 7, kind: input, shape index: {}]
  %s8 = inlined_call_operand.hbm [shape: f32[2,4,256], index: 8, kind: output, shape index: {}]
  %s9 = sld [smem:[#allocation0]]
  $region65: #{tpu_custom_call.1} parent=0
    _
  %s11 = ssub.s32 1, %s9
  %s12 = scalar_select 0, %s11, %s9
  $region1: #{tpu_custom_call.1} parent=0
    #allocation2 [shape = 'u8[8192]{0}', space=vmem, size = 0x2000, scoped, tag = 'output window, operand 0']
    #allocation3 [shape = 's32[2]{0}', space=sflag, size = 0x8, scoped, tag = 'scoped memory for tpu_custom_call.1']
    %13 = vsyncpa [#allocation3], 0
    %s14 = scalar_lea.sflag [#allocation3], 1
    %15 = vsyncpa %s14, 0
    loop: start=0, step=1, limit=4
    $region2: #{tpu_custom_call.1} parent=1 // loop_pre_header
      _
    $region3: #{tpu_custom_call.1} parent=1 // loop_header
      %s17 = sphi 0, %s21
      %p18 = scmp.ge.s32.totalorder %s17, 4
      %s24 = sphi 0, %s36
      %s25 = sphi 0, %s32
      %s26 = sphi 0, %s24
      %s27 = sphi 0, %s25
      %s28 = sphi 0, %s26
      %s29 = sphi 0, %s27
      %s39 = sphi 0, %s41
      %s42 = sphi 0, %s39
      %s43 = sphi 0, %s42
      %s59 = sphi 0, %s43
      %s67 = sphi 0, %s69
      %s70 = sphi 0, %s67
      %s71 = sphi 0, %s70
      %s87 = sphi 0, %s71
      %s91 = sphi 0, %s91
      %s93 = sphi 0, %s91
      %s94 = sphi 0, %s93
      %s108 = sphi 0, %s94
      %s112 = sphi 0, %s112
      %s114 = sphi 0, %s112
      %s115 = sphi 0, %s114
      %s129 = sphi 0, %s115
      %s133 = sphi 0, %s133
      %s135 = sphi 0, %s133
      %s136 = sphi 0, %s135
      %s150 = sphi 0, %s136
      %s154 = sphi 0, %s154
      %s156 = sphi 0, %s154
      %s157 = sphi 0, %s156
      %s171 = sphi 0, %s157
      %s175 = sphi 0, %s175
      %s177 = sphi 0, %s175
      %s178 = sphi 0, %s177
      %s192 = sphi 0, %s178
      %s196 = sphi 0, %s196
      %s198 = sphi 0, %s196
      %s199 = sphi 0, %s198
      %s213 = sphi 0, %s199
      %s221 = sphi 0, %s223
      %s224 = sphi 0, %s221
      %s225 = sphi 0, %s224
      %s241 = sphi 0, %s225
    $region4: #{tpu_custom_call.1} parent=1 // loop_header_branch
      %20 = sbr.rel (%p18) target = $region8
    $region5: #{tpu_custom_call.1} parent=1 // loop_body
      %s22 = ssub.s32 %s17, 1
      %s23 = ssub.s32 %s17, 2
      %s30 = sadd.s32 1, %s25
      %p31 = scmp.ge.s32.totalorder %s30, 1
      %s32 = scalar_select %p31, 0, %s30
      %s33 = sadd.s32 1, %s24
      %s34 = scalar_select %p31, %s33, %s24
      %p35 = scmp.ge.s32.totalorder %s34, 2
      %s36 = scalar_select %p35, 0, %s34
      %s37 = ssub.s32 %s24, %s36
      %p38 = scmp.eq.s32.totalorder %s37, 0
      %s40 = sadd.s32 %s39, 1
      %s41 = scalar_select %p38, %s39, %s40
      %p44 = pneg %p38
      %p45 = scmp.eq.s32.totalorder %s17, 1
      %p46 = por %p44, %p45
      %p47 = scmp.ne.s32.totalorder %s39, %s42
      %p48 = scmp.eq.s32.totalorder %s17, 0
      %p49 = por %p47, %p48
      %p50 = scmp.ne.s32.totalorder %s39, %s42
      %p51 = scmp.eq.s32.totalorder %s22, 1
      %p52 = por %p50, %p51
      %p53 = scmp.ne.s32.totalorder %s42, %s43
      %p54 = scmp.eq.s32.totalorder %s22, 0
      %p55 = por %p53, %p54
      %p56 = scmp.ne.s32.totalorder %s42, %s43
      %p57 = scmp.eq.s32.totalorder %s23, 1
      %p58 = por %p56, %p57
      %p60 = scmp.ne.s32.totalorder %s43, %s59
      %p61 = scmp.eq.s32.totalorder %s23, 0
      %p62 = por %p60, %p61
      %s63 = ssub.s32 %s24, %s36
      %s64 = ssub.s32 %s25, %s32
      %s65 = sor.u32 %s63, %s64
      %p66 = scmp.eq.s32.totalorder %s65, 0
      %s68 = sadd.s32 %s67, 1
      %s69 = scalar_select %p66, %s67, %s68
      %p72 = pneg %p66
      %p73 = scmp.eq.s32.totalorder %s17, 1
      %p74 = por %p72, %p73
      %p75 = scmp.ne.s32.totalorder %s67, %s70
      %p76 = scmp.eq.s32.totalorder %s17, 0
      %p77 = por %p75, %p76
      %p78 = scmp.ne.s32.totalorder %s67, %s70
      %p79 = scmp.eq.s32.totalorder %s22, 1
      %p80 = por %p78, %p79
      %p81 = scmp.ne.s32.totalorder %s70, %s71
      %p82 = scmp.eq.s32.totalorder %s22, 0
      %p83 = por %p81, %p82
      %p84 = scmp.ne.s32.totalorder %s70, %s71
      %p85 = scmp.eq.s32.totalorder %s23, 1
      %p86 = por %p84, %p85
      %p88 = scmp.ne.s32.totalorder %s71, %s87
      %p89 = scmp.eq.s32.totalorder %s23, 0
      %p90 = por %p88, %p89
      %s92 = sadd.s32 %s91, 1
      %p95 = scmp.eq.s32.totalorder %s17, 1
      %p96 = scmp.ne.s32.totalorder %s91, %s93
      %p97 = scmp.eq.s32.totalorder %s17, 0
      %p98 = por %p96, %p97
      %p99 = scmp.ne.s32.totalorder %s91, %s93
      %p100 = scmp.eq.s32.totalorder %s22, 1
      %p101 = por %p99, %p100
      %p102 = scmp.ne.s32.totalorder %s93, %s94
      %p103 = scmp.eq.s32.totalorder %s22, 0
      %p104 = por %p102, %p103
      %p105 = scmp.ne.s32.totalorder %s93, %s94
      %p106 = scmp.eq.s32.totalorder %s23, 1
      %p107 = por %p105, %p106
      %p109 = scmp.ne.s32.totalorder %s94, %s108
      %p110 = scmp.eq.s32.totalorder %s23, 0
      %p111 = por %p109, %p110
      %s113 = sadd.s32 %s112, 1
      %p116 = scmp.eq.s32.totalorder %s17, 1
      %p117 = scmp.ne.s32.totalorder %s112, %s114
      %p118 = scmp.eq.s32.totalorder %s17, 0
      %p119 = por %p117, %p118
      %p120 = scmp.ne.s32.totalorder %s112, %s114
      %p121 = scmp.eq.s32.totalorder %s22, 1
      %p122 = por %p120, %p121
      %p123 = scmp.ne.s32.totalorder %s114, %s115
      %p124 = scmp.eq.s32.totalorder %s22, 0
      %p125 = por %p123, %p124
      %p126 = scmp.ne.s32.totalorder %s114, %s115
      %p127 = scmp.eq.s32.totalorder %s23, 1
      %p128 = por %p126, %p127
      %p130 = scmp.ne.s32.totalorder %s115, %s129
      %p131 = scmp.eq.s32.totalorder %s23, 0
      %p132 = por %p130, %p131
      %s134 = sadd.s32 %s133, 1
      %p137 = scmp.eq.s32.totalorder %s17, 1
      %p138 = scmp.ne.s32.totalorder %s133, %s135
      %p139 = scmp.eq.s32.totalorder %s17, 0
      %p140 = por %p138, %p139
      %p141 = scmp.ne.s32.totalorder %s133, %s135
      %p142 = scmp.eq.s32.totalorder %s22, 1
      %p143 = por %p141, %p142
      %p144 = scmp.ne.s32.totalorder %s135, %s136
      %p145 = scmp.eq.s32.totalorder %s22, 0
      %p146 = por %p144, %p145
      %p147 = scmp.ne.s32.totalorder %s135, %s136
      %p148 = scmp.eq.s32.totalorder %s23, 1
      %p149 = por %p147, %p148
      %p151 = scmp.ne.s32.totalorder %s136, %s150
      %p152 = scmp.eq.s32.totalorder %s23, 0
      %p153 = por %p151, %p152
      %s155 = sadd.s32 %s154, 1
      %p158 = scmp.eq.s32.totalorder %s17, 1
      %p159 = scmp.ne.s32.totalorder %s154, %s156
      %p160 = scmp.eq.s32.totalorder %s17, 0
      %p161 = por %p159, %p160
      %p162 = scmp.ne.s32.totalorder %s154, %s156
      %p163 = scmp.eq.s32.totalorder %s22, 1
      %p164 = por %p162, %p163
      %p165 = scmp.ne.s32.totalorder %s156, %s157
      %p166 = scmp.eq.s32.totalorder %s22, 0
      %p167 = por %p165, %p166
      %p168 = scmp.ne.s32.totalorder %s156, %s157
      %p169 = scmp.eq.s32.totalorder %s23, 1
      %p170 = por %p168, %p169
      %p172 = scmp.ne.s32.totalorder %s157, %s171
      %p173 = scmp.eq.s32.totalorder %s23, 0
      %p174 = por %p172, %p173
      %s176 = sadd.s32 %s175, 1
      %p179 = scmp.eq.s32.totalorder %s17, 1
      %p180 = scmp.ne.s32.totalorder %s175, %s177
      %p181 = scmp.eq.s32.totalorder %s17, 0
      %p182 = por %p180, %p181
      %p183 = scmp.ne.s32.totalorder %s175, %s177
      %p184 = scmp.eq.s32.totalorder %s22, 1
      %p185 = por %p183, %p184
      %p186 = scmp.ne.s32.totalorder %s177, %s178
      %p187 = scmp.eq.s32.totalorder %s22, 0
      %p188 = por %p186, %p187
      %p189 = scmp.ne.s32.totalorder %s177, %s178
      %p190 = scmp.eq.s32.totalorder %s23, 1
      %p191 = por %p189, %p190
      %p193 = scmp.ne.s32.totalorder %s178, %s192
      %p194 = scmp.eq.s32.totalorder %s23, 0
      %p195 = por %p193, %p194
      %s197 = sadd.s32 %s196, 1
      %p200 = scmp.eq.s32.totalorder %s17, 1
      %p201 = scmp.ne.s32.totalorder %s196, %s198
      %p202 = scmp.eq.s32.totalorder %s17, 0
      %p203 = por %p201, %p202
      %p204 = scmp.ne.s32.totalorder %s196, %s198
      %p205 = scmp.eq.s32.totalorder %s22, 1
      %p206 = por %p204, %p205
      %p207 = scmp.ne.s32.totalorder %s198, %s199
      %p208 = scmp.eq.s32.totalorder %s22, 0
      %p209 = por %p207, %p208
      %p210 = scmp.ne.s32.totalorder %s198, %s199
      %p211 = scmp.eq.s32.totalorder %s23, 1
      %p212 = por %p210, %p211
      %p214 = scmp.ne.s32.totalorder %s199, %s213
      %p215 = scmp.eq.s32.totalorder %s23, 0
      %p216 = por %p214, %p215
      %s217 = ssub.s32 %s24, %s36
      %s218 = ssub.s32 %s25, %s32
      %s219 = sor.u32 %s217, %s218
      %p220 = scmp.eq.s32.totalorder %s219, 0
      %s222 = sadd.s32 %s221, 1
      %s223 = scalar_select %p220, %s221, %s222
      %p226 = pneg %p220
      %p227 = scmp.eq.s32.totalorder %s17, 1
      %p228 = por %p226, %p227
      %p229 = scmp.ne.s32.totalorder %s221, %s224
      %p230 = scmp.eq.s32.totalorder %s17, 0
      %p231 = por %p229, %p230
      %p232 = scmp.ne.s32.totalorder %s221, %s224
      %p233 = scmp.eq.s32.totalorder %s22, 1
      %p234 = por %p232, %p233
      %p235 = scmp.ne.s32.totalorder %s224, %s225
      %p236 = scmp.eq.s32.totalorder %s22, 0
      %p237 = por %p235, %p236
      %p238 = scmp.ne.s32.totalorder %s224, %s225
      %p239 = scmp.eq.s32.totalorder %s23, 1
      %p240 = por %p238, %p239
      %p242 = scmp.ne.s32.totalorder %s225, %s241
      %p243 = scmp.eq.s32.totalorder %s23, 0
      %p244 = por %p242, %p243
      %p245 = scmp.le.s32.totalorder 1, %s17
      %p246 = scmp.lt.s32.totalorder %s17, 3
      %p247 = pnand %p245, %p246
      %p248 = pneg %p247
      // Predicated region
      $region9: #{tpu_custom_call.1} parent=5 // pred_check
        _
      $region10: #{tpu_custom_call.1} parent=5 // pred_check_branch
        %250 = sbr.rel (%p247) target = $region12
      $region11: #{tpu_custom_call.1} parent=5 // pred_region
        %s251 = ssub.s32 %s17, 1
        // Predicated region
        $region13: #{tpu_custom_call.1} parent=11 // pred_check
          %p252 = pneg %p104
        $region14: #{tpu_custom_call.1} parent=11 // pred_check_branch
          %254 = sbr.rel (%p252) target = $region16
        $region15: #{tpu_custom_call.1} parent=11 // pred_region
          _
        $region16: #{tpu_custom_call.1} parent=11 // pred_fallthru
          _
        // Predicated region
        $region17: #{tpu_custom_call.1} parent=11 // pred_check
          %p255 = pneg %p125
        $region18: #{tpu_custom_call.1} parent=11 // pred_check_branch
          %257 = sbr.rel (%p255) target = $region20
        $region19: #{tpu_custom_call.1} parent=11 // pred_region
          _
        $region20: #{tpu_custom_call.1} parent=11 // pred_fallthru
          _
        // Predicated region
        $region21: #{tpu_custom_call.1} parent=11 // pred_check
          %p258 = pneg %p146
        $region22: #{tpu_custom_call.1} parent=11 // pred_check_branch
          %260 = sbr.rel (%p258) target = $region24
        $region23: #{tpu_custom_call.1} parent=11 // pred_region
          _
        $region24: #{tpu_custom_call.1} parent=11 // pred_fallthru
          _
        // Predicated region
        $region25: #{tpu_custom_call.1} parent=11 // pred_check
          %p261 = pneg %p167
        $region26: #{tpu_custom_call.1} parent=11 // pred_check_branch
          %263 = sbr.rel (%p261) target = $region28
        $region27: #{tpu_custom_call.1} parent=11 // pred_region
          _
        $region28: #{tpu_custom_call.1} parent=11 // pred_fallthru
          _
        // Predicated region
        $region29: #{tpu_custom_call.1} parent=11 // pred_check
          %p264 = pneg %p188
        $region30: #{tpu_custom_call.1} parent=11 // pred_check_branch
          %266 = sbr.rel (%p264) target = $region32
        $region31: #{tpu_custom_call.1} parent=11 // pred_region
          _
        $region32: #{tpu_custom_call.1} parent=11 // pred_fallthru
          _
        // Predicated region
        $region33: #{tpu_custom_call.1} parent=11 // pred_check
          %p267 = pneg %p209
        $region34: #{tpu_custom_call.1} parent=11 // pred_check_branch
          %269 = sbr.rel (%p267) target = $region36
        $region35: #{tpu_custom_call.1} parent=11 // pred_region
          _
        $region36: #{tpu_custom_call.1} parent=11 // pred_fallthru
          _
      $region12: #{tpu_custom_call.1} parent=5 // pred_fallthru
        _
      %p270 = scmp.lt.s32.totalorder %s17, 2
      // Predicated region
      $region37: #{tpu_custom_call.1} parent=5 // pred_check
        %p271 = pneg %p270
      $region38: #{tpu_custom_call.1} parent=5 // pred_check_branch
        %273 = sbr.rel (%p271) target = $region40
      $region39: #{tpu_custom_call.1} parent=5 // pred_region
        // Predicated region
        $region41: #{tpu_custom_call.1} parent=39 // pred_check
          %p274 = pneg %p49
        $region42: #{tpu_custom_call.1} parent=39 // pred_check_branch
          %276 = sbr.rel (%p274) target = $region44
        $region43: #{tpu_custom_call.1} parent=39 // pred_region
          %p277 = scmp.lt.s32.totalorder %s24, 1
          %s278 = scalar_select %p277, %s24, 1
          %s279 = smul.addr %s278, 32
          %s280 = smul.addr %s279, 8
          %s281 = scalar_lea.vmem %s0, %s280
        $region44: #{tpu_custom_call.1} parent=39 // pred_fallthru
          _
        // Predicated region
        $region45: #{tpu_custom_call.1} parent=39 // pred_check
          %p282 = pneg %p77
        $region46: #{tpu_custom_call.1} parent=39 // pred_check_branch
          %284 = sbr.rel (%p282) target = $region48
        $region47: #{tpu_custom_call.1} parent=39 // pred_region
          %s285 = smul.u32 32, %s25
          %p286 = scmp.lt.s32.totalorder %s24, 1
          %s287 = scalar_select %p286, %s24, 1
          %p288 = scmp.lt.s32.totalorder %s285, 31
          %s289 = scalar_select %p288, %s285, 31
          %s290 = smul.addr %s287, 32
          %s291 = sadd.s32 %s289, %s290
          %s292 = smul.addr %s291, 8
          %s293 = scalar_lea.vmem %s1, %s292
          %s294 = smul.u32 32, %s25
        $region48: #{tpu_custom_call.1} parent=39 // pred_fallthru
          _
      $region40: #{tpu_custom_call.1} parent=5 // pred_fallthru
        _
      %p295 = scmp.le.s32.totalorder 1, %s17
      %p296 = scmp.lt.s32.totalorder %s17, 3
      %p297 = pnand %p295, %p296
      %p298 = pneg %p297
      // Predicated region
      $region49: #{tpu_custom_call.1} parent=5 // pred_check
        _
      $region50: #{tpu_custom_call.1} parent=5 // pred_check_branch
        %300 = sbr.rel (%p297) target = $region52
      $region51: #{tpu_custom_call.1} parent=5 // pred_region
        %s301 = ssub.s32 %s17, 1
        %p302 = scmp.lt.s32.totalorder %s26, 1
        %s303 = scalar_select %p302, %s26, 1
        %s304 = smul.addr %s303, 32
        %s305 = smul.addr %s304, 8
        %s306 = scalar_lea.vmem %s0, %s305
        %p307 = pneg %p55
        %p308 = pneg %p52
        %s309 = smul.u32 32, %s27
        %p310 = scmp.lt.s32.totalorder %s26, 1
        %s311 = scalar_select %p310, %s26, 1
        %p312 = scmp.lt.s32.totalorder %s309, 31
        %s313 = scalar_select %p312, %s309, 31
        %s314 = smul.addr %s311, 32
        %s315 = sadd.s32 %s313, %s314
        %s316 = smul.addr %s315, 8
        %s317 = scalar_lea.vmem %s1, %s316
        %p318 = pneg %p83
        %p319 = pneg %p80
        %p320 = pneg %p104
        %p321 = pneg %p101
        %p322 = pneg %p125
        %p323 = pneg %p122
        %p324 = pneg %p146
        %p325 = pneg %p143
        %p326 = pneg %p167
        %p327 = pneg %p164
        %p328 = pneg %p188
        %p329 = pneg %p185
        %p330 = pneg %p209
        %p331 = pneg %p206
        %p332 = pneg %p237
        %p333 = pneg %p234
        %s334 = sand.u32 %s224, 1
        %s335 = scalar_lea.sflag [#allocation3], %s334
        %s336 = sand.u32 %s224, 1
        %s337 = smul.addr %s336, 8
        %s338 = scalar_lea.vmem [#allocation2], %s337
        %p339 = scmp.lt.s32.totalorder %s26, 1
        %s340 = scalar_select %p339, %s26, 1
        %s341 = smul.addr %s340, 32
        %s342 = smul.addr %s341, 8
        %s343 = scalar_lea.vmem %s0, %s342
        %s344 = smul.u32 32, %s27
        %p345 = scmp.lt.s32.totalorder %s26, 1
        %s346 = scalar_select %p345, %s26, 1
        %p347 = scmp.lt.s32.totalorder %s344, 31
        %s348 = scalar_select %p347, %s344, 31
        %s349 = smul.addr %s346, 32
        %s350 = sadd.s32 %s348, %s349
        %s351 = smul.addr %s350, 8
        %s352 = scalar_lea.vmem %s1, %s351
        %s353 = smul.u32 32, %s27
        %s354 = smul.u32 2, %s27
        %v355 = vld [vmem:[%s343] sm:$0xff]
        %v356 = vld [vmem:[%s343 + $0x8] sm:$0xff]
        %v357 = vld [vmem:[%s343 + $0x10] sm:$0xff]
        %v358 = vld [vmem:[%s343 + $0x18] sm:$0xff]
        %v359 = vld [vmem:[%s343 + $0x20] sm:$0xff]
        %v360 = vld [vmem:[%s343 + $0x28] sm:$0xff]
        %v361 = vld [vmem:[%s343 + $0x30] sm:$0xff]
        %v362 = vld [vmem:[%s343 + $0x38] sm:$0xff]
        %v363 = vld [vmem:[%s343 + $0x40] sm:$0xff]
        %v364 = vld [vmem:[%s343 + $0x48] sm:$0xff]
        %v365 = vld [vmem:[%s343 + $0x50] sm:$0xff]
        %v366 = vld [vmem:[%s343 + $0x58] sm:$0xff]
        %v367 = vld [vmem:[%s343 + $0x60] sm:$0xff]
        %v368 = vld [vmem:[%s343 + $0x68] sm:$0xff]
        %v369 = vld [vmem:[%s343 + $0x70] sm:$0xff]
        %v370 = vld [vmem:[%s343 + $0x78] sm:$0xff]
        %v371 = vld [vmem:[%s343 + $0x80] sm:$0xff]
        %v372 = vld [vmem:[%s343 + $0x88] sm:$0xff]
        %v373 = vld [vmem:[%s343 + $0x90] sm:$0xff]
        %v374 = vld [vmem:[%s343 + $0x98] sm:$0xff]
        %v375 = vld [vmem:[%s343 + $0xa0] sm:$0xff]
        %v376 = vld [vmem:[%s343 + $0xa8] sm:$0xff]
        %v377 = vld [vmem:[%s343 + $0xb0] sm:$0xff]
        %v378 = vld [vmem:[%s343 + $0xb8] sm:$0xff]
        %v379 = vld [vmem:[%s343 + $0xc0] sm:$0xff]
        %v380 = vld [vmem:[%s343 + $0xc8] sm:$0xff]
        %v381 = vld [vmem:[%s343 + $0xd0] sm:$0xff]
        %v382 = vld [vmem:[%s343 + $0xd8] sm:$0xff]
        %v383 = vld [vmem:[%s343 + $0xe0] sm:$0xff]
        %v384 = vld [vmem:[%s343 + $0xe8] sm:$0xff]
        %v385 = vld [vmem:[%s343 + $0xf0] sm:$0xff]
        %v386 = vld [vmem:[%s343 + $0xf8] sm:$0xff]
        %v387 = vld [vmem:[%s352] sm:$0xff]
        %v388 = vld [vmem:[%s352 + $0x8] sm:$0xff]
        %v389 = vld [vmem:[%s352 + $0x10] sm:$0xff]
        %v390 = vld [vmem:[%s352 + $0x18] sm:$0xff]
        %v391 = vld [vmem:[%s352 + $0x20] sm:$0xff]
        %v392 = vld [vmem:[%s352 + $0x28] sm:$0xff]
        %v393 = vld [vmem:[%s352 + $0x30] sm:$0xff]
        %v394 = vld [vmem:[%s352 + $0x38] sm:$0xff]
        %v395 = vld [vmem:[%s352 + $0x40] sm:$0xff]
        %v396 = vld [vmem:[%s352 + $0x48] sm:$0xff]
        %v397 = vld [vmem:[%s352 + $0x50] sm:$0xff]
        %v398 = vld [vmem:[%s352 + $0x58] sm:$0xff]
        %v399 = vld [vmem:[%s352 + $0x60] sm:$0xff]
        %v400 = vld [vmem:[%s352 + $0x68] sm:$0xff]
        %v401 = vld [vmem:[%s352 + $0x70] sm:$0xff]
        %v402 = vld [vmem:[%s352 + $0x78] sm:$0xff]
        %v403 = vld [vmem:[%s352 + $0x80] sm:$0xff]
        %v404 = vld [vmem:[%s352 + $0x88] sm:$0xff]
        %v405 = vld [vmem:[%s352 + $0x90] sm:$0xff]
        %v406 = vld [vmem:[%s352 + $0x98] sm:$0xff]
        %v407 = vld [vmem:[%s352 + $0xa0] sm:$0xff]
        %v408 = vld [vmem:[%s352 + $0xa8] sm:$0xff]
        %v409 = vld [vmem:[%s352 + $0xb0] sm:$0xff]
        %v410 = vld [vmem:[%s352 + $0xb8] sm:$0xff]
        %v411 = vld [vmem:[%s352 + $0xc0] sm:$0xff]
        %v412 = vld [vmem:[%s352 + $0xc8] sm:$0xff]
        %v413 = vld [vmem:[%s352 + $0xd0] sm:$0xff]
        %v414 = vld [vmem:[%s352 + $0xd8] sm:$0xff]
        %v415 = vld [vmem:[%s352 + $0xe0] sm:$0xff]
        %v416 = vld [vmem:[%s352 + $0xe8] sm:$0xff]
        %v417 = vld [vmem:[%s352 + $0xf0] sm:$0xff]
        %v418 = vld [vmem:[%s352 + $0xf8] sm:$0xff]
        %v419 = vld [vmem:[%s2] sm:$0xf]
        %v420 = vld [vmem:[%s3] sm:$0x1]
        %v422 = vlaneseq
        %v423 = vshrl.u32 %v422, 7
        %v424 = vsub.s32 0, %v423
        %v425 = vrot.slane %v420, %v424
        %vm427 = vcmask 31744
        %v429 = vsel %vm427, %v387, 0
        %v432 = vsel %vm427, %v388, 0
        %v435 = vsel %vm427, %v389, 0
        %v438 = vsel %vm427, %v390, 0
        %v441 = vsel %vm427, %v391, 0
        %v444 = vsel %vm427, %v392, 0
        %v447 = vsel %vm427, %v393, 0
        %v450 = vsel %vm427, %v394, 0
        %v453 = vsel %vm427, %v395, 0
        %v456 = vsel %vm427, %v396, 0
        %v459 = vsel %vm427, %v397, 0
        %v462 = vsel %vm427, %v398, 0
        %v465 = vsel %vm427, %v399, 0
        %v468 = vsel %vm427, %v400, 0
        %v471 = vsel %vm427, %v401, 0
        %v474 = vsel %vm427, %v402, 0
        %v477 = vsel %vm427, %v403, 0
        %v480 = vsel %vm427, %v404, 0
        %v483 = vsel %vm427, %v405, 0
        %v486 = vsel %vm427, %v406, 0
        %v489 = vsel %vm427, %v407, 0
        %v492 = vsel %vm427, %v408, 0
        %v495 = vsel %vm427, %v409, 0
        %v498 = vsel %vm427, %v410, 0
        %v501 = vsel %vm427, %v411, 0
        %v504 = vsel %vm427, %v412, 0
        %v507 = vsel %vm427, %v413, 0
        %v510 = vsel %vm427, %v414, 0
        %v513 = vsel %vm427, %v415, 0
        %v516 = vsel %vm427, %v416, 0
        %v519 = vsel %vm427, %v417, 0
        %v522 = vsel %vm427, %v418, 0
        %vm524 = vcmask 1043456
        %v526 = vsel %vm524, %v419, 0
        %528 = vmatprep.subr.mxu0 0.0
        %529 = vmatpush1.msra.mxu0 %v526
        %530 = vmatprep.subr.mxu0 0.0
        %531 = vmatpush1.msra.mxu0 0.0
        %532 = vmatprep.subr.mxu0 0.0
        %533 = vmatpush1.msra.mxu0 0.0
        %534 = vmatprep.subr.mxu0 0.0
        %535 = vmatpush1.msra.mxu0 0.0
        %536 = vmatprep.subr.mxu0 0.0
        %537 = vmatpush1.msra.mxu0 0.0
        %538 = vmatprep.subr.mxu0 0.0
        %539 = vmatpush1.msra.mxu0 0.0
        %540 = vmatprep.subr.mxu0 0.0
        %541 = vmatpush1.msra.mxu0 0.0
        %542 = vmatprep.subr.mxu0 0.0
        %543 = vmatpush1.msra.mxu0 0.0
        %544 = vmatprep.subr.mxu0 0.0
        %545 = vmatpush1.msra.mxu0 0.0
        %546 = vmatprep.subr.mxu0 0.0
        %547 = vmatpush1.msra.mxu0 0.0
        %548 = vmatprep.subr.mxu0 0.0
        %549 = vmatpush1.msra.mxu0 0.0
        %550 = vmatprep.subr.mxu0 0.0
        %551 = vmatpush1.msra.mxu0 0.0
        %552 = vmatprep.subr.mxu0 0.0
        %553 = vmatpush1.msra.mxu0 0.0
        %554 = vmatprep.subr.mxu0 0.0
        %555 = vmatpush1.msra.mxu0 0.0
        %556 = vmatprep.subr.mxu0 0.0
        %557 = vmatpush1.msra.mxu0 0.0
        %558 = vmatprep.subr.mxu0 0.0
        %559 = vmatpush1.msra.mxu0 0.0
        %560 = vmatprep.subr.mxu0 0.0
        %561 = vmatpush1.msra.mxu0 0.0
        %562 = vmatprep.subr.mxu0 0.0
        %563 = vmatpush1.msra.mxu0 0.0
        %564 = vmatprep.subr.mxu0 0.0
        %565 = vmatpush1.msra.mxu0 0.0
        %566 = vmatprep.subr.mxu0 0.0
        %567 = vmatpush1.msra.mxu0 0.0
        %568 = vmatprep.subr.mxu0 0.0
        %569 = vmatpush1.msra.mxu0 0.0
        %570 = vmatprep.subr.mxu0 0.0
        %571 = vmatpush1.msra.mxu0 0.0
        %572 = vmatprep.subr.mxu0 0.0
        %573 = vmatpush1.msra.mxu0 0.0
        %574 = vmatprep.subr.mxu0 0.0
        %575 = vmatpush1.msra.mxu0 0.0
        %576 = vmatprep.subr.mxu0 0.0
        %577 = vmatpush1.msra.mxu0 0.0
        %578 = vmatprep.subr.mxu0 0.0
        %579 = vmatpush1.msra.mxu0 0.0
        %580 = vmatprep.subr.mxu0 0.0
        %581 = vmatpush1.msra.mxu0 0.0
        %582 = vmatprep.subr.mxu0 0.0
        %583 = vmatpush1.msra.mxu0 0.0
        %584 = vmatprep.subr.mxu0 0.0
        %585 = vmatpush1.msra.mxu0 0.0
        %586 = vmatprep.subr.mxu0 0.0
        %587 = vmatpush1.msra.mxu0 0.0
        %588 = vmatprep.subr.mxu0 0.0
        %589 = vmatpush1.msra.mxu0 0.0
        %590 = vmatprep.subr.mxu0 0.0
        %591 = vmatpush1.msra.mxu0 0.0
        %592 = vmatprep.mubr.f32.mxu0 0.0
        %593 = vmatmul.mubr.f32.gmra.mrb[0].mxu0 %v429
        %v594 = vpop.f32.mrb[0].mxu0
        %v595 = vadd.f32 %v425, %v594
        %v596 = vpop.f32.mrb[0].mxu0
        %597 = vmatprep.mubr.f32.mxu0 0.0
        %598 = vmatmul.mubr.f32.gmra.mrb[0].mxu0 %v432
        %v599 = vpop.f32.mrb[0].mxu0
        %v600 = vadd.f32 %v425, %v599
        %v601 = vpop.f32.mrb[0].mxu0
        %602 = vmatprep.mubr.f32.mxu0 0.0
        %603 = vmatmul.mubr.f32.gmra.mrb[0].mxu0 %v435
        %v604 = vpop.f32.mrb[0].mxu0
        %v605 = vadd.f32 %v425, %v604
        %v606 = vpop.f32.mrb[0].mxu0
        %607 = vmatprep.mubr.f32.mxu0 0.0
        %608 = vmatmul.mubr.f32.gmra.mrb[0].mxu0 %v438
        %v609 = vpop.f32.mrb[0].mxu0
        %v610 = vadd.f32 %v425, %v609
        %v611 = vpop.f32.mrb[0].mxu0
        %612 = vmatprep.mubr.f32.mxu0 0.0
        %613 = vmatmul.mubr.f32.gmra.mrb[0].mxu0 %v441
        %v614 = vpop.f32.mrb[0].mxu0
        %v615 = vadd.f32 %v425, %v614
        %v616 = vpop.f32.mrb[0].mxu0
        %617 = vmatprep.mubr.f32.mxu0 0.0
        %618 = vmatmul.mubr.f32.gmra.mrb[0].mxu0 %v444
        %v619 = vpop.f32.mrb[0].mxu0
        %v620 = vadd.f32 %v425, %v619
        %v621 = vpop.f32.mrb[0].mxu0
        %622 = vmatprep.mubr.f32.mxu0 0.0
        %623 = vmatmul.mubr.f32.gmra.mrb[0].mxu0 %v447
        %v624 = vpop.f32.mrb[0].mxu0
        %v625 = vadd.f32 %v425, %v624
        %v626 = vpop.f32.mrb[0].mxu0
        %627 = vmatprep.mubr.f32.mxu0 0.0
        %628 = vmatmul.mubr.f32.gmra.mrb[0].mxu0 %v450
        %v629 = vpop.f32.mrb[0].mxu0
        %v630 = vadd.f32 %v425, %v629
        %v631 = vpop.f32.mrb[0].mxu0
        %632 = vmatprep.mubr.f32.mxu0 0.0
        %633 = vmatmul.mubr.f32.gmra.mrb[0].mxu0 %v453
        %v634 = vpop.f32.mrb[0].mxu0
        %v635 = vadd.f32 %v425, %v634
        %v636 = vpop.f32.mrb[0].mxu0
        %637 = vmatprep.mubr.f32.mxu0 0.0
        %638 = vmatmul.mubr.f32.gmra.mrb[0].mxu0 %v456
        %v639 = vpop.f32.mrb[0].mxu0
        %v640 = vadd.f32 %v425, %v639
        %v641 = vpop.f32.mrb[0].mxu0
        %642 = vmatprep.mubr.f32.mxu0 0.0
        %643 = vmatmul.mubr.f32.gmra.mrb[0].mxu0 %v459
        %v644 = vpop.f32.mrb[0].mxu0
        %v645 = vadd.f32 %v425, %v644
        %v646 = vpop.f32.mrb[0].mxu0
        %647 = vmatprep.mubr.f32.mxu0 0.0
        %648 = vmatmul.mubr.f32.gmra.mrb[0].mxu0 %v462
        %v649 = vpop.f32.mrb[0].mxu0
        %v650 = vadd.f32 %v425, %v649
        %v651 = vpop.f32.mrb[0].mxu0
        %652 = vmatprep.mubr.f32.mxu0 0.0
        %653 = vmatmul.mubr.f32.gmra.mrb[0].mxu0 %v465
        %v654 = vpop.f32.mrb[0].mxu0
        %v655 = vadd.f32 %v425, %v654
        %v656 = vpop.f32.mrb[0].mxu0
        %657 = vmatprep.mubr.f32.mxu0 0.0
        %658 = vmatmul.mubr.f32.gmra.mrb[0].mxu0 %v468
        %v659 = vpop.f32.mrb[0].mxu0
        %v660 = vadd.f32 %v425, %v659
        %v661 = vpop.f32.mrb[0].mxu0
        %662 = vmatprep.mubr.f32.mxu0 0.0
        %663 = vmatmul.mubr.f32.gmra.mrb[0].mxu0 %v471
        %v664 = vpop.f32.mrb[0].mxu0
        %v665 = vadd.f32 %v425, %v664
        %v666 = vpop.f32.mrb[0].mxu0
        %667 = vmatprep.mubr.f32.mxu0 0.0
        %668 = vmatmul.mubr.f32.gmra.mrb[0].mxu0 %v474
        %v669 = vpop.f32.mrb[0].mxu0
        %v670 = vadd.f32 %v425, %v669
        %v671 = vpop.f32.mrb[0].mxu0
        %672 = vmatprep.mubr.f32.mxu0 0.0
        %673 = vmatmul.mubr.f32.gmra.mrb[0].mxu0 %v477
        %v674 = vpop.f32.mrb[0].mxu0
        %v675 = vadd.f32 %v425, %v674
        %v676 = vpop.f32.mrb[0].mxu0
        %677 = vmatprep.mubr.f32.mxu0 0.0
        %678 = vmatmul.mubr.f32.gmra.mrb[0].mxu0 %v480
        %v679 = vpop.f32.mrb[0].mxu0
        %v680 = vadd.f32 %v425, %v679
        %v681 = vpop.f32.mrb[0].mxu0
        %682 = vmatprep.mubr.f32.mxu0 0.0
        %683 = vmatmul.mubr.f32.gmra.mrb[0].mxu0 %v483
        %v684 = vpop.f32.mrb[0].mxu0
        %v685 = vadd.f32 %v425, %v684
        %v686 = vpop.f32.mrb[0].mxu0
        %687 = vmatprep.mubr.f32.mxu0 0.0
        %688 = vmatmul.mubr.f32.gmra.mrb[0].mxu0 %v486
        %v689 = vpop.f32.mrb[0].mxu0
        %v690 = vadd.f32 %v425, %v689
        %v691 = vpop.f32.mrb[0].mxu0
        %692 = vmatprep.mubr.f32.mxu0 0.0
        %693 = vmatmul.mubr.f32.gmra.mrb[0].mxu0 %v489
        %v694 = vpop.f32.mrb[0].mxu0
        %v695 = vadd.f32 %v425, %v694
        %v696 = vpop.f32.mrb[0].mxu0
        %697 = vmatprep.mubr.f32.mxu0 0.0
        %698 = vmatmul.mubr.f32.gmra.mrb[0].mxu0 %v492
        %v699 = vpop.f32.mrb[0].mxu0
        %v700 = vadd.f32 %v425, %v699
        %v701 = vpop.f32.mrb[0].mxu0
        %702 = vmatprep.mubr.f32.mxu0 0.0
        %703 = vmatmul.mubr.f32.gmra.mrb[0].mxu0 %v495
        %v704 = vpop.f32.mrb[0].mxu0
        %v705 = vadd.f32 %v425, %v704
        %v706 = vpop.f32.mrb[0].mxu0
        %707 = vmatprep.mubr.f32.mxu0 0.0
        %708 = vmatmul.mubr.f32.gmra.mrb[0].mxu0 %v498
        %v709 = vpop.f32.mrb[0].mxu0
        %v710 = vadd.f32 %v425, %v709
        %v711 = vpop.f32.mrb[0].mxu0
        %712 = vmatprep.mubr.f32.mxu0 0.0
        %713 = vmatmul.mubr.f32.gmra.mrb[0].mxu0 %v501
        %v714 = vpop.f32.mrb[0].mxu0
        %v715 = vadd.f32 %v425, %v714
        %v716 = vpop.f32.mrb[0].mxu0
        %717 = vmatprep.mubr.f32.mxu0 0.0
        %718 = vmatmul.mubr.f32.gmra.mrb[0].mxu0 %v504
        %v719 = vpop.f32.mrb[0].mxu0
        %v720 = vadd.f32 %v425, %v719
        %v721 = vpop.f32.mrb[0].mxu0
        %722 = vmatprep.mubr.f32.mxu0 0.0
        %723 = vmatmul.mubr.f32.gmra.mrb[0].mxu0 %v507
        %v724 = vpop.f32.mrb[0].mxu0
        %v725 = vadd.f32 %v425, %v724
        %v726 = vpop.f32.mrb[0].mxu0
        %727 = vmatprep.mubr.f32.mxu0 0.0
        %728 = vmatmul.mubr.f32.gmra.mrb[0].mxu0 %v510
        %v729 = vpop.f32.mrb[0].mxu0
        %v730 = vadd.f32 %v425, %v729
        %v731 = vpop.f32.mrb[0].mxu0
        %732 = vmatprep.mubr.f32.mxu0 0.0
        %733 = vmatmul.mubr.f32.gmra.mrb[0].mxu0 %v513
        %v734 = vpop.f32.mrb[0].mxu0
        %v735 = vadd.f32 %v425, %v734
        %v736 = vpop.f32.mrb[0].mxu0
        %737 = vmatprep.mubr.f32.mxu0 0.0
        %738 = vmatmul.mubr.f32.gmra.mrb[0].mxu0 %v516
        %v739 = vpop.f32.mrb[0].mxu0
        %v740 = vadd.f32 %v425, %v739
        %v741 = vpop.f32.mrb[0].mxu0
        %742 = vmatprep.mubr.f32.mxu0 0.0
        %743 = vmatmul.mubr.f32.gmra.mrb[0].mxu0 %v519
        %v744 = vpop.f32.mrb[0].mxu0
        %v745 = vadd.f32 %v425, %v744
        %v746 = vpop.f32.mrb[0].mxu0
        %747 = vmatprep.mubr.f32.mxu0 0.0
        %748 = vmatmul.mubr.f32.gmra.mrb[0].mxu0 %v522
        %v749 = vpop.f32.mrb[0].mxu0
        %v750 = vadd.f32 %v425, %v749
        %v751 = vpop.f32.mrb[0].mxu0
        %752 = vdwg.mxu0
        %v753 = vld [vmem:[%s4] sm:$0xf]
        %v754 = vld [vmem:[%s5] sm:$0xf]
        %756 = vset.pattern.permute.xlu0 0
        %757 = vperm.xlu0 %756, %v754
        %v758 = vpop.permute.xlu0 %757
        %v761 = vsel %vm427, %v753, 0
        %v764 = vsel %vm427, %v355, 0
        %v767 = vsel %vm427, %v356, 0
        %v770 = vsel %vm427, %v357, 0
        %v773 = vsel %vm427, %v358, 0
        %v776 = vsel %vm427, %v359, 0
        %v779 = vsel %vm427, %v360, 0
        %v782 = vsel %vm427, %v361, 0
        %v785 = vsel %vm427, %v362, 0
        %v788 = vsel %vm427, %v363, 0
        %v791 = vsel %vm427, %v364, 0
        %v794 = vsel %vm427, %v365, 0
        %v797 = vsel %vm427, %v366, 0
        %v800 = vsel %vm427, %v367, 0
        %v803 = vsel %vm427, %v368, 0
        %v806 = vsel %vm427, %v369, 0
        %v809 = vsel %vm427, %v370, 0
        %v812 = vsel %vm427, %v371, 0
        %v815 = vsel %vm427, %v372, 0
        %v818 = vsel %vm427, %v373, 0
        %v821 = vsel %vm427, %v374, 0
        %v824 = vsel %vm427, %v375, 0
        %v827 = vsel %vm427, %v376, 0
        %v830 = vsel %vm427, %v377, 0
        %v833 = vsel %vm427, %v378, 0
        %v836 = vsel %vm427, %v379, 0
        %v839 = vsel %vm427, %v380, 0
        %v842 = vsel %vm427, %v381, 0
        %v845 = vsel %vm427, %v382, 0
        %v848 = vsel %vm427, %v383, 0
        %v851 = vsel %vm427, %v384, 0
        %v854 = vsel %vm427, %v385, 0
        %v857 = vsel %vm427, %v386, 0
        %859 = vmatprep.subr.mxu0 0.0
        %860 = vmatpush1.xpose.msra.mxu0 %v764
        %861 = vmatprep.subr.mxu0 0.0
        %862 = vmatpush1.xpose.msra.mxu0 %v767
        %863 = vmatprep.subr.mxu0 0.0
        %864 = vmatpush1.xpose.msra.mxu0 %v770
        %865 = vmatprep.subr.mxu0 0.0
        %866 = vmatpush1.xpose.msra.mxu0 %v773
        %867 = vmatprep.subr.mxu0 0.0
        %868 = vmatpush1.xpose.msra.mxu0 %v776
        %869 = vmatprep.subr.mxu0 0.0
        %870 = vmatpush1.xpose.msra.mxu0 %v779
        %871 = vmatprep.subr.mxu0 0.0
        %872 = vmatpush1.xpose.msra.mxu0 %v782
        %873 = vmatprep.subr.mxu0 0.0
        %874 = vmatpush1.xpose.msra.mxu0 %v785
        %875 = vmatprep.subr.mxu0 0.0
        %876 = vmatpush1.xpose.msra.mxu0 %v788
        %877 = vmatprep.subr.mxu0 0.0
        %878 = vmatpush1.xpose.msra.mxu0 %v791
        %879 = vmatprep.subr.mxu0 0.0
        %880 = vmatpush1.xpose.msra.mxu0 %v794
        %881 = vmatprep.subr.mxu0 0.0
        %882 = vmatpush1.xpose.msra.mxu0 %v797
        %883 = vmatprep.subr.mxu0 0.0
        %884 = vmatpush1.xpose.msra.mxu0 %v800
        %885 = vmatprep.subr.mxu0 0.0
        %886 = vmatpush1.xpose.msra.mxu0 %v803
        %887 = vmatprep.subr.mxu0 0.0
        %888 = vmatpush1.xpose.msra.mxu0 %v806
        %889 = vmatprep.subr.mxu0 0.0
        %890 = vmatpush1.xpose.msra.mxu0 %v809
        %891 = vmatprep.subr.mxu0 0.0
        %892 = vmatpush1.xpose.msra.mxu0 %v812
        %893 = vmatprep.subr.mxu0 0.0
        %894 = vmatpush1.xpose.msra.mxu0 %v815
        %895 = vmatprep.subr.mxu0 0.0
        %896 = vmatpush1.xpose.msra.mxu0 %v818
        %897 = vmatprep.subr.mxu0 0.0
        %898 = vmatpush1.xpose.msra.mxu0 %v821
        %899 = vmatprep.subr.mxu0 0.0
        %900 = vmatpush1.xpose.msra.mxu0 %v824
        %901 = vmatprep.subr.mxu0 0.0
        %902 = vmatpush1.xpose.msra.mxu0 %v827
        %903 = vmatprep.subr.mxu0 0.0
        %904 = vmatpush1.xpose.msra.mxu0 %v830
        %905 = vmatprep.subr.mxu0 0.0
        %906 = vmatpush1.xpose.msra.mxu0 %v833
        %907 = vmatprep.subr.mxu0 0.0
        %908 = vmatpush1.xpose.msra.mxu0 %v836
        %909 = vmatprep.subr.mxu0 0.0
        %910 = vmatpush1.xpose.msra.mxu0 %v839
        %911 = vmatprep.subr.mxu0 0.0
        %912 = vmatpush1.xpose.msra.mxu0 %v842
        %913 = vmatprep.subr.mxu0 0.0
        %914 = vmatpush1.xpose.msra.mxu0 %v845
        %915 = vmatprep.subr.mxu0 0.0
        %916 = vmatpush1.xpose.msra.mxu0 %v848
        %917 = vmatprep.subr.mxu0 0.0
        %918 = vmatpush1.xpose.msra.mxu0 %v851
        %919 = vmatprep.subr.mxu0 0.0
        %920 = vmatpush1.xpose.msra.mxu0 %v854
        %921 = vmatprep.subr.mxu0 0.0
        %922 = vmatpush1.xpose.msra.mxu0 %v857
        %923 = vmatprep.mubr.f32.mxu0 0.0
        %924 = vmatmul.mubr.f32.gmra.mrb[0].mxu0 %v761
        %v925 = vpop.f32.mrb[0].mxu0
        %v926 = vadd.f32 %v758, %v925
        %v927 = vpop.f32.mrb[0].mxu0
        %v928 = vadd.f32 %v758, %v927
        %929 = vdwg.mxu0
        %v930 = vld [vmem:[%s6] sm:$0xf]
        %v931 = vld [vmem:[%s7] sm:$0xf]
        %933 = vset.pattern.permute.xlu0 0
        %934 = vperm.xlu0 %933, %v931
        %v935 = vpop.permute.xlu0 %934
        %v938 = vsel %vm427, %v930, 0
        %940 = vmatprep.subr.mxu0 0.0
        %941 = vmatpush1.xpose.msra.mxu0 %v764
        %942 = vmatprep.subr.mxu0 0.0
        %943 = vmatpush1.xpose.msra.mxu0 %v767
        %944 = vmatprep.subr.mxu0 0.0
        %945 = vmatpush1.xpose.msra.mxu0 %v770
        %946 = vmatprep.subr.mxu0 0.0
        %947 = vmatpush1.xpose.msra.mxu0 %v773
        %948 = vmatprep.subr.mxu0 0.0
        %949 = vmatpush1.xpose.msra.mxu0 %v776
        %950 = vmatprep.subr.mxu0 0.0
        %951 = vmatpush1.xpose.msra.mxu0 %v779
        %952 = vmatprep.subr.mxu0 0.0
        %953 = vmatpush1.xpose.msra.mxu0 %v782
        %954 = vmatprep.subr.mxu0 0.0
        %955 = vmatpush1.xpose.msra.mxu0 %v785
        %956 = vmatprep.subr.mxu0 0.0
        %957 = vmatpush1.xpose.msra.mxu0 %v788
        %958 = vmatprep.subr.mxu0 0.0
        %959 = vmatpush1.xpose.msra.mxu0 %v791
        %960 = vmatprep.subr.mxu0 0.0
        %961 = vmatpush1.xpose.msra.mxu0 %v794
        %962 = vmatprep.subr.mxu0 0.0
        %963 = vmatpush1.xpose.msra.mxu0 %v797
        %964 = vmatprep.subr.mxu0 0.0
        %965 = vmatpush1.xpose.msra.mxu0 %v800
        %966 = vmatprep.subr.mxu0 0.0
        %967 = vmatpush1.xpose.msra.mxu0 %v803
        %968 = vmatprep.subr.mxu0 0.0
        %969 = vmatpush1.xpose.msra.mxu0 %v806
        %970 = vmatprep.subr.mxu0 0.0
        %971 = vmatpush1.xpose.msra.mxu0 %v809
        %972 = vmatprep.subr.mxu0 0.0
        %973 = vmatpush1.xpose.msra.mxu0 %v812
        %974 = vmatprep.subr.mxu0 0.0
        %975 = vmatpush1.xpose.msra.mxu0 %v815
        %976 = vmatprep.subr.mxu0 0.0
        %977 = vmatpush1.xpose.msra.mxu0 %v818
        %978 = vmatprep.subr.mxu0 0.0
        %979 = vmatpush1.xpose.msra.mxu0 %v821
        %980 = vmatprep.subr.mxu0 0.0
        %981 = vmatpush1.xpose.msra.mxu0 %v824
        %982 = vmatprep.subr.mxu0 0.0
        %983 = vmatpush1.xpose.msra.mxu0 %v827
        %984 = vmatprep.subr.mxu0 0.0
        %985 = vmatpush1.xpose.msra.mxu0 %v830
        %986 = vmatprep.subr.mxu0 0.0
        %987 = vmatpush1.xpose.msra.mxu0 %v833
        %988 = vmatprep.subr.mxu0 0.0
        %989 = vmatpush1.xpose.msra.mxu0 %v836
        %990 = vmatprep.subr.mxu0 0.0
        %991 = vmatpush1.xpose.msra.mxu0 %v839
        %992 = vmatprep.subr.mxu0 0.0
        %993 = vmatpush1.xpose.msra.mxu0 %v842
        %994 = vmatprep.subr.mxu0 0.0
        %995 = vmatpush1.xpose.msra.mxu0 %v845
        %996 = vmatprep.subr.mxu0 0.0
        %997 = vmatpush1.xpose.msra.mxu0 %v848
        %998 = vmatprep.subr.mxu0 0.0
        %999 = vmatpush1.xpose.msra.mxu0 %v851
        %1000 = vmatprep.subr.mxu0 0.0
        %1001 = vmatpush1.xpose.msra.mxu0 %v854
        %1002 = vmatprep.subr.mxu0 0.0
        %1003 = vmatpush1.xpose.msra.mxu0 %v857
        %1004 = vmatprep.mubr.f32.mxu0 0.0
        %1005 = vmatmul.mubr.f32.gmra.mrb[0].mxu0 %v938
        %v1006 = vpop.f32.mrb[0].mxu0
        %v1007 = vadd.f32 %v935, %v1006
        %v1008 = vpop.f32.mrb[0].mxu0
        %v1009 = vadd.f32 %v935, %v1008
        %1010 = vdwg.mxu0
        %v1012 = vsel %vm427, %v595, 0
        %v1015 = vsel %vm427, %v600, 0
        %v1018 = vsel %vm427, %v605, 0
        %v1021 = vsel %vm427, %v610, 0
        %v1024 = vsel %vm427, %v615, 0
        %v1027 = vsel %vm427, %v620, 0
        %v1030 = vsel %vm427, %v625, 0
        %v1033 = vsel %vm427, %v630, 0
        %v1036 = vsel %vm427, %v635, 0
        %v1039 = vsel %vm427, %v640, 0
        %v1042 = vsel %vm427, %v645, 0
        %v1045 = vsel %vm427, %v650, 0
        %v1048 = vsel %vm427, %v655, 0
        %v1051 = vsel %vm427, %v660, 0
        %v1054 = vsel %vm427, %v665, 0
        %v1057 = vsel %vm427, %v670, 0
        %v1060 = vsel %vm427, %v675, 0
        %v1063 = vsel %vm427, %v680, 0
        %v1066 = vsel %vm427, %v685, 0
        %v1069 = vsel %vm427, %v690, 0
        %v1072 = vsel %vm427, %v695, 0
        %v1075 = vsel %vm427, %v700, 0
        %v1078 = vsel %vm427, %v705, 0
        %v1081 = vsel %vm427, %v710, 0
        %v1084 = vsel %vm427, %v715, 0
        %v1087 = vsel %vm427, %v720, 0
        %v1090 = vsel %vm427, %v725, 0
        %v1093 = vsel %vm427, %v730, 0
        %v1096 = vsel %vm427, %v735, 0
        %v1099 = vsel %vm427, %v740, 0
        %v1102 = vsel %vm427, %v745, 0
        %v1105 = vsel %vm427, %v750, 0
        %v1108 = vsel %vm524, %v926, 0
        %v1111 = vsel %vm524, %v928, 0
        %1113 = vmatprep.subr.mxu0 %v1111
        %1114 = vmatpush1.msra.mxu0 %v1108
        %1115 = vmatprep.subr.mxu0 0.0
        %1116 = vmatpush1.msra.mxu0 0.0
        %1117 = vmatprep.subr.mxu0 0.0
        %1118 = vmatpush1.msra.mxu0 0.0
        %1119 = vmatprep.subr.mxu0 0.0
        %1120 = vmatpush1.msra.mxu0 0.0
        %1121 = vmatprep.subr.mxu0 0.0
        %1122 = vmatpush1.msra.mxu0 0.0
        %1123 = vmatprep.subr.mxu0 0.0
        %1124 = vmatpush1.msra.mxu0 0.0
        %1125 = vmatprep.subr.mxu0 0.0
        %1126 = vmatpush1.msra.mxu0 0.0
        %1127 = vmatprep.subr.mxu0 0.0
        %1128 = vmatpush1.msra.mxu0 0.0
        %1129 = vmatprep.subr.mxu0 0.0
        %1130 = vmatpush1.msra.mxu0 0.0
        %1131 = vmatprep.subr.mxu0 0.0
        %1132 = vmatpush1.msra.mxu0 0.0
        %1133 = vmatprep.subr.mxu0 0.0
        %1134 = vmatpush1.msra.mxu0 0.0
        %1135 = vmatprep.subr.mxu0 0.0
        %1136 = vmatpush1.msra.mxu0 0.0
        %1137 = vmatprep.subr.mxu0 0.0
        %1138 = vmatpush1.msra.mxu0 0.0
        %1139 = vmatprep.subr.mxu0 0.0
        %1140 = vmatpush1.msra.mxu0 0.0
        %1141 = vmatprep.subr.mxu0 0.0
        %1142 = vmatpush1.msra.mxu0 0.0
        %1143 = vmatprep.subr.mxu0 0.0
        %1144 = vmatpush1.msra.mxu0 0.0
        %1145 = vmatprep.subr.mxu0 0.0
        %1146 = vmatpush1.msra.mxu0 0.0
        %1147 = vmatprep.subr.mxu0 0.0
        %1148 = vmatpush1.msra.mxu0 0.0
        %1149 = vmatprep.subr.mxu0 0.0
        %1150 = vmatpush1.msra.mxu0 0.0
        %1151 = vmatprep.subr.mxu0 0.0
        %1152 = vmatpush1.msra.mxu0 0.0
        %1153 = vmatprep.subr.mxu0 0.0
        %1154 = vmatpush1.msra.mxu0 0.0
        %1155 = vmatprep.subr.mxu0 0.0
        %1156 = vmatpush1.msra.mxu0 0.0
        %1157 = vmatprep.subr.mxu0 0.0
        %1158 = vmatpush1.msra.mxu0 0.0
        %1159 = vmatprep.subr.mxu0 0.0
        %1160 = vmatpush1.msra.mxu0 0.0
        %1161 = vmatprep.subr.mxu0 0.0
        %1162 = vmatpush1.msra.mxu0 0.0
        %1163 = vmatprep.subr.mxu0 0.0
        %1164 = vmatpush1.msra.mxu0 0.0
        %1165 = vmatprep.subr.mxu0 0.0
        %1166 = vmatpush1.msra.mxu0 0.0
        %1167 = vmatprep.subr.mxu0 0.0
        %1168 = vmatpush1.msra.mxu0 0.0
        %1169 = vmatprep.subr.mxu0 0.0
        %1170 = vmatpush1.msra.mxu0 0.0
        %1171 = vmatprep.subr.mxu0 0.0
        %1172 = vmatpush1.msra.mxu0 0.0
        %1173 = vmatprep.subr.mxu0 0.0
        %1174 = vmatpush1.msra.mxu0 0.0
        %1175 = vmatprep.subr.mxu0 0.0
        %1176 = vmatpush1.msra.mxu0 0.0
        %1177 = vmatprep.mubr.f32.mxu0 0.0
        %1178 = vmatmul.mubr.f32.gmra.mrb[0].mxu0 %v1012
        %v1179 = vpop.f32.mrb[0].mxu0
        %v1180 = vadd.f32 0.0, %v1179
        %v1181 = vpop.f32.mrb[0].mxu0
        %v1182 = vadd.f32 0.0, %v1181
        %1183 = vmatprep.mubr.f32.mxu0 0.0
        %1184 = vmatmul.mubr.f32.gmra.mrb[0].mxu0 %v1015
        %v1185 = vpop.f32.mrb[0].mxu0
        %v1186 = vadd.f32 0.0, %v1185
        %v1187 = vpop.f32.mrb[0].mxu0
        %v1188 = vadd.f32 0.0, %v1187
        %1189 = vmatprep.mubr.f32.mxu0 0.0
        %1190 = vmatmul.mubr.f32.gmra.mrb[0].mxu0 %v1018
        %v1191 = vpop.f32.mrb[0].mxu0
        %v1192 = vadd.f32 0.0, %v1191
        %v1193 = vpop.f32.mrb[0].mxu0
        %v1194 = vadd.f32 0.0, %v1193
        %1195 = vmatprep.mubr.f32.mxu0 0.0
        %1196 = vmatmul.mubr.f32.gmra.mrb[0].mxu0 %v1021
        %v1197 = vpop.f32.mrb[0].mxu0
        %v1198 = vadd.f32 0.0, %v1197
        %v1199 = vpop.f32.mrb[0].mxu0
        %v1200 = vadd.f32 0.0, %v1199
        %1201 = vmatprep.mubr.f32.mxu0 0.0
        %1202 = vmatmul.mubr.f32.gmra.mrb[0].mxu0 %v1024
        %v1203 = vpop.f32.mrb[0].mxu0
        %v1204 = vadd.f32 0.0, %v1203
        %v1205 = vpop.f32.mrb[0].mxu0
        %v1206 = vadd.f32 0.0, %v1205
        %1207 = vmatprep.mubr.f32.mxu0 0.0
        %1208 = vmatmul.mubr.f32.gmra.mrb[0].mxu0 %v1027
        %v1209 = vpop.f32.mrb[0].mxu0
        %v1210 = vadd.f32 0.0, %v1209
        %v1211 = vpop.f32.mrb[0].mxu0
        %v1212 = vadd.f32 0.0, %v1211
        %1213 = vmatprep.mubr.f32.mxu0 0.0
        %1214 = vmatmul.mubr.f32.gmra.mrb[0].mxu0 %v1030
        %v1215 = vpop.f32.mrb[0].mxu0
        %v1216 = vadd.f32 0.0, %v1215
        %v1217 = vpop.f32.mrb[0].mxu0
        %v1218 = vadd.f32 0.0, %v1217
        %1219 = vmatprep.mubr.f32.mxu0 0.0
        %1220 = vmatmul.mubr.f32.gmra.mrb[0].mxu0 %v1033
        %v1221 = vpop.f32.mrb[0].mxu0
        %v1222 = vadd.f32 0.0, %v1221
        %v1223 = vpop.f32.mrb[0].mxu0
        %v1224 = vadd.f32 0.0, %v1223
        %1225 = vmatprep.mubr.f32.mxu0 0.0
        %1226 = vmatmul.mubr.f32.gmra.mrb[0].mxu0 %v1036
        %v1227 = vpop.f32.mrb[0].mxu0
        %v1228 = vadd.f32 0.0, %v1227
        %v1229 = vpop.f32.mrb[0].mxu0
        %v1230 = vadd.f32 0.0, %v1229
        %1231 = vmatprep.mubr.f32.mxu0 0.0
        %1232 = vmatmul.mubr.f32.gmra.mrb[0].mxu0 %v1039
        %v1233 = vpop.f32.mrb[0].mxu0
        %v1234 = vadd.f32 0.0, %v1233
        %v1235 = vpop.f32.mrb[0].mxu0
        %v1236 = vadd.f32 0.0, %v1235
        %1237 = vmatprep.mubr.f32.mxu0 0.0
        %1238 = vmatmul.mubr.f32.gmra.mrb[0].mxu0 %v1042
        %v1239 = vpop.f32.mrb[0].mxu0
        %v1240 = vadd.f32 0.0, %v1239
        %v1241 = vpop.f32.mrb[0].mxu0
        %v1242 = vadd.f32 0.0, %v1241
        %1243 = vmatprep.mubr.f32.mxu0 0.0
        %1244 = vmatmul.mubr.f32.gmra.mrb[0].mxu0 %v1045
        %v1245 = vpop.f32.mrb[0].mxu0
        %v1246 = vadd.f32 0.0, %v1245
        %v1247 = vpop.f32.mrb[0].mxu0
        %v1248 = vadd.f32 0.0, %v1247
        %1249 = vmatprep.mubr.f32.mxu0 0.0
        %1250 = vmatmul.mubr.f32.gmra.mrb[0].mxu0 %v1048
        %v1251 = vpop.f32.mrb[0].mxu0
        %v1252 = vadd.f32 0.0, %v1251
        %v1253 = vpop.f32.mrb[0].mxu0
        %v1254 = vadd.f32 0.0, %v1253
        %1255 = vmatprep.mubr.f32.mxu0 0.0
        %1256 = vmatmul.mubr.f32.gmra.mrb[0].mxu0 %v1051
        %v1257 = vpop.f32.mrb[0].mxu0
        %v1258 = vadd.f32 0.0, %v1257
        %v1259 = vpop.f32.mrb[0].mxu0
        %v1260 = vadd.f32 0.0, %v1259
        %1261 = vmatprep.mubr.f32.mxu0 0.0
        %1262 = vmatmul.mubr.f32.gmra.mrb[0].mxu0 %v1054
        %v1263 = vpop.f32.mrb[0].mxu0
        %v1264 = vadd.f32 0.0, %v1263
        %v1265 = vpop.f32.mrb[0].mxu0
        %v1266 = vadd.f32 0.0, %v1265
        %1267 = vmatprep.mubr.f32.mxu0 0.0
        %1268 = vmatmul.mubr.f32.gmra.mrb[0].mxu0 %v1057
        %v1269 = vpop.f32.mrb[0].mxu0
        %v1270 = vadd.f32 0.0, %v1269
        %v1271 = vpop.f32.mrb[0].mxu0
        %v1272 = vadd.f32 0.0, %v1271
        %1273 = vmatprep.mubr.f32.mxu0 0.0
        %1274 = vmatmul.mubr.f32.gmra.mrb[0].mxu0 %v1060
        %v1275 = vpop.f32.mrb[0].mxu0
        %v1276 = vadd.f32 0.0, %v1275
        %v1277 = vpop.f32.mrb[0].mxu0
        %v1278 = vadd.f32 0.0, %v1277
        %1279 = vmatprep.mubr.f32.mxu0 0.0
        %1280 = vmatmul.mubr.f32.gmra.mrb[0].mxu0 %v1063
        %v1281 = vpop.f32.mrb[0].mxu0
        %v1282 = vadd.f32 0.0, %v1281
        %v1283 = vpop.f32.mrb[0].mxu0
        %v1284 = vadd.f32 0.0, %v1283
        %1285 = vmatprep.mubr.f32.mxu0 0.0
        %1286 = vmatmul.mubr.f32.gmra.mrb[0].mxu0 %v1066
        %v1287 = vpop.f32.mrb[0].mxu0
        %v1288 = vadd.f32 0.0, %v1287
        %v1289 = vpop.f32.mrb[0].mxu0
        %v1290 = vadd.f32 0.0, %v1289
        %1291 = vmatprep.mubr.f32.mxu0 0.0
        %1292 = vmatmul.mubr.f32.gmra.mrb[0].mxu0 %v1069
        %v1293 = vpop.f32.mrb[0].mxu0
        %v1294 = vadd.f32 0.0, %v1293
        %v1295 = vpop.f32.mrb[0].mxu0
        %v1296 = vadd.f32 0.0, %v1295
        %1297 = vmatprep.mubr.f32.mxu0 0.0
        %1298 = vmatmul.mubr.f32.gmra.mrb[0].mxu0 %v1072
        %v1299 = vpop.f32.mrb[0].mxu0
        %v1300 = vadd.f32 0.0, %v1299
        %v1301 = vpop.f32.mrb[0].mxu0
        %v1302 = vadd.f32 0.0, %v1301
        %1303 = vmatprep.mubr.f32.mxu0 0.0
        %1304 = vmatmul.mubr.f32.gmra.mrb[0].mxu0 %v1075
        %v1305 = vpop.f32.mrb[0].mxu0
        %v1306 = vadd.f32 0.0, %v1305
        %v1307 = vpop.f32.mrb[0].mxu0
        %v1308 = vadd.f32 0.0, %v1307
        %1309 = vmatprep.mubr.f32.mxu0 0.0
        %1310 = vmatmul.mubr.f32.gmra.mrb[0].mxu0 %v1078
        %v1311 = vpop.f32.mrb[0].mxu0
        %v1312 = vadd.f32 0.0, %v1311
        %v1313 = vpop.f32.mrb[0].mxu0
        %v1314 = vadd.f32 0.0, %v1313
        %1315 = vmatprep.mubr.f32.mxu0 0.0
        %1316 = vmatmul.mubr.f32.gmra.mrb[0].mxu0 %v1081
        %v1317 = vpop.f32.mrb[0].mxu0
        %v1318 = vadd.f32 0.0, %v1317
        %v1319 = vpop.f32.mrb[0].mxu0
        %v1320 = vadd.f32 0.0, %v1319
        %1321 = vmatprep.mubr.f32.mxu0 0.0
        %1322 = vmatmul.mubr.f32.gmra.mrb[0].mxu0 %v1084
        %v1323 = vpop.f32.mrb[0].mxu0
        %v1324 = vadd.f32 0.0, %v1323
        %v1325 = vpop.f32.mrb[0].mxu0
        %v1326 = vadd.f32 0.0, %v1325
        %1327 = vmatprep.mubr.f32.mxu0 0.0
        %1328 = vmatmul.mubr.f32.gmra.mrb[0].mxu0 %v1087
        %v1329 = vpop.f32.mrb[0].mxu0
        %v1330 = vadd.f32 0.0, %v1329
        %v1331 = vpop.f32.mrb[0].mxu0
        %v1332 = vadd.f32 0.0, %v1331
        %1333 = vmatprep.mubr.f32.mxu0 0.0
        %1334 = vmatmul.mubr.f32.gmra.mrb[0].mxu0 %v1090
        %v1335 = vpop.f32.mrb[0].mxu0
        %v1336 = vadd.f32 0.0, %v1335
        %v1337 = vpop.f32.mrb[0].mxu0
        %v1338 = vadd.f32 0.0, %v1337
        %1339 = vmatprep.mubr.f32.mxu0 0.0
        %1340 = vmatmul.mubr.f32.gmra.mrb[0].mxu0 %v1093
        %v1341 = vpop.f32.mrb[0].mxu0
        %v1342 = vadd.f32 0.0, %v1341
        %v1343 = vpop.f32.mrb[0].mxu0
        %v1344 = vadd.f32 0.0, %v1343
        %1345 = vmatprep.mubr.f32.mxu0 0.0
        %1346 = vmatmul.mubr.f32.gmra.mrb[0].mxu0 %v1096
        %v1347 = vpop.f32.mrb[0].mxu0
        %v1348 = vadd.f32 0.0, %v1347
        %v1349 = vpop.f32.mrb[0].mxu0
        %v1350 = vadd.f32 0.0, %v1349
        %1351 = vmatprep.mubr.f32.mxu0 0.0
        %1352 = vmatmul.mubr.f32.gmra.mrb[0].mxu0 %v1099
        %v1353 = vpop.f32.mrb[0].mxu0
        %v1354 = vadd.f32 0.0, %v1353
        %v1355 = vpop.f32.mrb[0].mxu0
        %v1356 = vadd.f32 0.0, %v1355
        %1357 = vmatprep.mubr.f32.mxu0 0.0
        %1358 = vmatmul.mubr.f32.gmra.mrb[0].mxu0 %v1102
        %v1359 = vpop.f32.mrb[0].mxu0
        %v1360 = vadd.f32 0.0, %v1359
        %v1361 = vpop.f32.mrb[0].mxu0
        %v1362 = vadd.f32 0.0, %v1361
        %1363 = vmatprep.mubr.f32.mxu0 0.0
        %1364 = vmatmul.mubr.f32.gmra.mrb[0].mxu0 %v1105
        %v1365 = vpop.f32.mrb[0].mxu0
        %v1366 = vadd.f32 0.0, %v1365
        %v1367 = vpop.f32.mrb[0].mxu0
        %v1368 = vadd.f32 0.0, %v1367
        %1369 = vdwg.mxu0
        %v1370 = vmax.f32 %v1180, %v1182
        %1371 = vmax.xlane.f32.xlu0 %v1370
        %v1372 = vpop.xlane.xlu0 %1371
        %v1373 = vmax.f32 %v1186, %v1188
        %1374 = vmax.xlane.f32.xlu0 %v1373
        %v1375 = vpop.xlane.xlu0 %1374
        %v1376 = vmax.f32 %v1192, %v1194
        %1377 = vmax.xlane.f32.xlu0 %v1376
        %v1378 = vpop.xlane.xlu0 %1377
        %v1379 = vmax.f32 %v1198, %v1200
        %1380 = vmax.xlane.f32.xlu0 %v1379
        %v1381 = vpop.xlane.xlu0 %1380
        %v1382 = vmax.f32 %v1204, %v1206
        %1383 = vmax.xlane.f32.xlu0 %v1382
        %v1384 = vpop.xlane.xlu0 %1383
        %v1385 = vmax.f32 %v1210, %v1212
        %1386 = vmax.xlane.f32.xlu0 %v1385
        %v1387 = vpop.xlane.xlu0 %1386
        %v1388 = vmax.f32 %v1216, %v1218
        %1389 = vmax.xlane.f32.xlu0 %v1388
        %v1390 = vpop.xlane.xlu0 %1389
        %v1391 = vmax.f32 %v1222, %v1224
        %1392 = vmax.xlane.f32.xlu0 %v1391
        %v1393 = vpop.xlane.xlu0 %1392
        %v1394 = vmax.f32 %v1228, %v1230
        %1395 = vmax.xlane.f32.xlu0 %v1394
        %v1396 = vpop.xlane.xlu0 %1395
        %v1397 = vmax.f32 %v1234, %v1236
        %1398 = vmax.xlane.f32.xlu0 %v1397
        %v1399 = vpop.xlane.xlu0 %1398
        %v1400 = vmax.f32 %v1240, %v1242
        %1401 = vmax.xlane.f32.xlu0 %v1400
        %v1402 = vpop.xlane.xlu0 %1401
        %v1403 = vmax.f32 %v1246, %v1248
        %1404 = vmax.xlane.f32.xlu0 %v1403
        %v1405 = vpop.xlane.xlu0 %1404
        %v1406 = vmax.f32 %v1252, %v1254
        %1407 = vmax.xlane.f32.xlu0 %v1406
        %v1408 = vpop.xlane.xlu0 %1407
        %v1409 = vmax.f32 %v1258, %v1260
        %1410 = vmax.xlane.f32.xlu0 %v1409
        %v1411 = vpop.xlane.xlu0 %1410
        %v1412 = vmax.f32 %v1264, %v1266
        %1413 = vmax.xlane.f32.xlu0 %v1412
        %v1414 = vpop.xlane.xlu0 %1413
        %v1415 = vmax.f32 %v1270, %v1272
        %1416 = vmax.xlane.f32.xlu0 %v1415
        %v1417 = vpop.xlane.xlu0 %1416
        %v1418 = vmax.f32 %v1276, %v1278
        %1419 = vmax.xlane.f32.xlu0 %v1418
        %v1420 = vpop.xlane.xlu0 %1419
        %v1421 = vmax.f32 %v1282, %v1284
        %1422 = vmax.xlane.f32.xlu0 %v1421
        %v1423 = vpop.xlane.xlu0 %1422
        %v1424 = vmax.f32 %v1288, %v1290
        %1425 = vmax.xlane.f32.xlu0 %v1424
        %v1426 = vpop.xlane.xlu0 %1425
        %v1427 = vmax.f32 %v1294, %v1296
        %1428 = vmax.xlane.f32.xlu0 %v1427
        %v1429 = vpop.xlane.xlu0 %1428
        %v1430 = vmax.f32 %v1300, %v1302
        %1431 = vmax.xlane.f32.xlu0 %v1430
        %v1432 = vpop.xlane.xlu0 %1431
        %v1433 = vmax.f32 %v1306, %v1308
        %1434 = vmax.xlane.f32.xlu0 %v1433
        %v1435 = vpop.xlane.xlu0 %1434
        %v1436 = vmax.f32 %v1312, %v1314
        %1437 = vmax.xlane.f32.xlu0 %v1436
        %v1438 = vpop.xlane.xlu0 %1437
        %v1439 = vmax.f32 %v1318, %v1320
        %1440 = vmax.xlane.f32.xlu0 %v1439
        %v1441 = vpop.xlane.xlu0 %1440
        %v1442 = vmax.f32 %v1324, %v1326
        %1443 = vmax.xlane.f32.xlu0 %v1442
        %v1444 = vpop.xlane.xlu0 %1443
        %v1445 = vmax.f32 %v1330, %v1332
        %1446 = vmax.xlane.f32.xlu0 %v1445
        %v1447 = vpop.xlane.xlu0 %1446
        %v1448 = vmax.f32 %v1336, %v1338
        %1449 = vmax.xlane.f32.xlu0 %v1448
        %v1450 = vpop.xlane.xlu0 %1449
        %v1451 = vmax.f32 %v1342, %v1344
        %1452 = vmax.xlane.f32.xlu0 %v1451
        %v1453 = vpop.xlane.xlu0 %1452
        %v1454 = vmax.f32 %v1348, %v1350
        %1455 = vmax.xlane.f32.xlu0 %v1454
        %v1456 = vpop.xlane.xlu0 %1455
        %v1457 = vmax.f32 %v1354, %v1356
        %1458 = vmax.xlane.f32.xlu0 %v1457
        %v1459 = vpop.xlane.xlu0 %1458
        %v1460 = vmax.f32 %v1360, %v1362
        %1461 = vmax.xlane.f32.xlu0 %v1460
        %v1462 = vpop.xlane.xlu0 %1461
        %v1463 = vmax.f32 %v1366, %v1368
        %1464 = vmax.xlane.f32.xlu0 %v1463
        %v1465 = vpop.xlane.xlu0 %1464
        %v1466 = vsub.f32 %v1180, %v1372
        %v1467 = vsub.f32 %v1182, %v1372
        %v1468 = vsub.f32 %v1186, %v1375
        %v1469 = vsub.f32 %v1188, %v1375
        %v1470 = vsub.f32 %v1192, %v1378
        %v1471 = vsub.f32 %v1194, %v1378
        %v1472 = vsub.f32 %v1198, %v1381
        %v1473 = vsub.f32 %v1200, %v1381
        %v1474 = vsub.f32 %v1204, %v1384
        %v1475 = vsub.f32 %v1206, %v1384
        %v1476 = vsub.f32 %v1210, %v1387
        %v1477 = vsub.f32 %v1212, %v1387
        %v1478 = vsub.f32 %v1216, %v1390
        %v1479 = vsub.f32 %v1218, %v1390
        %v1480 = vsub.f32 %v1222, %v1393
        %v1481 = vsub.f32 %v1224, %v1393
        %v1482 = vsub.f32 %v1228, %v1396
        %v1483 = vsub.f32 %v1230, %v1396
        %v1484 = vsub.f32 %v1234, %v1399
        %v1485 = vsub.f32 %v1236, %v1399
        %v1486 = vsub.f32 %v1240, %v1402
        %v1487 = vsub.f32 %v1242, %v1402
        %v1488 = vsub.f32 %v1246, %v1405
        %v1489 = vsub.f32 %v1248, %v1405
        %v1490 = vsub.f32 %v1252, %v1408
        %v1491 = vsub.f32 %v1254, %v1408
        %v1492 = vsub.f32 %v1258, %v1411
        %v1493 = vsub.f32 %v1260, %v1411
        %v1494 = vsub.f32 %v1264, %v1414
        %v1495 = vsub.f32 %v1266, %v1414
        %v1496 = vsub.f32 %v1270, %v1417
        %v1497 = vsub.f32 %v1272, %v1417
        %v1498 = vsub.f32 %v1276, %v1420
        %v1499 = vsub.f32 %v1278, %v1420
        %v1500 = vsub.f32 %v1282, %v1423
        %v1501 = vsub.f32 %v1284, %v1423
        %v1502 = vsub.f32 %v1288, %v1426
        %v1503 = vsub.f32 %v1290, %v1426
        %v1504 = vsub.f32 %v1294, %v1429
        %v1505 = vsub.f32 %v1296, %v1429
        %v1506 = vsub.f32 %v1300, %v1432
        %v1507 = vsub.f32 %v1302, %v1432
        %v1508 = vsub.f32 %v1306, %v1435
        %v1509 = vsub.f32 %v1308, %v1435
        %v1510 = vsub.f32 %v1312, %v1438
        %v1511 = vsub.f32 %v1314, %v1438
        %v1512 = vsub.f32 %v1318, %v1441
        %v1513 = vsub.f32 %v1320, %v1441
        %v1514 = vsub.f32 %v1324, %v1444
        %v1515 = vsub.f32 %v1326, %v1444
        %v1516 = vsub.f32 %v1330, %v1447
        %v1517 = vsub.f32 %v1332, %v1447
        %v1518 = vsub.f32 %v1336, %v1450
        %v1519 = vsub.f32 %v1338, %v1450
        %v1520 = vsub.f32 %v1342, %v1453
        %v1521 = vsub.f32 %v1344, %v1453
        %v1522 = vsub.f32 %v1348, %v1456
        %v1523 = vsub.f32 %v1350, %v1456
        %v1524 = vsub.f32 %v1354, %v1459
        %v1525 = vsub.f32 %v1356, %v1459
        %v1526 = vsub.f32 %v1360, %v1462
        %v1527 = vsub.f32 %v1362, %v1462
        %v1528 = vsub.f32 %v1366, %v1465
        %v1529 = vsub.f32 %v1368, %v1465
        %v1530 = vmul.f32 %v1466, 1.442695
        %v1531 = vpow.pop %v1530
        %v1532 = vmul.f32 %v1467, 1.442695
        %v1533 = vpow.pop %v1532
        %v1534 = vmul.f32 %v1468, 1.442695
        %v1535 = vpow.pop %v1534
        %v1536 = vmul.f32 %v1469, 1.442695
        %v1537 = vpow.pop %v1536
        %v1538 = vmul.f32 %v1470, 1.442695
        %v1539 = vpow.pop %v1538
        %v1540 = vmul.f32 %v1471, 1.442695
        %v1541 = vpow.pop %v1540
        %v1542 = vmul.f32 %v1472, 1.442695
        %v1543 = vpow.pop %v1542
        %v1544 = vmul.f32 %v1473, 1.442695
        %v1545 = vpow.pop %v1544
        %v1546 = vmul.f32 %v1474, 1.442695
        %v1547 = vpow.pop %v1546
        %v1548 = vmul.f32 %v1475, 1.442695
        %v1549 = vpow.pop %v1548
        %v1550 = vmul.f32 %v1476, 1.442695
        %v1551 = vpow.pop %v1550
        %v1552 = vmul.f32 %v1477, 1.442695
        %v1553 = vpow.pop %v1552
        %v1554 = vmul.f32 %v1478, 1.442695
        %v1555 = vpow.pop %v1554
        %v1556 = vmul.f32 %v1479, 1.442695
        %v1557 = vpow.pop %v1556
        %v1558 = vmul.f32 %v1480, 1.442695
        %v1559 = vpow.pop %v1558
        %v1560 = vmul.f32 %v1481, 1.442695
        %v1561 = vpow.pop %v1560
        %v1562 = vmul.f32 %v1482, 1.442695
        %v1563 = vpow.pop %v1562
        %v1564 = vmul.f32 %v1483, 1.442695
        %v1565 = vpow.pop %v1564
        %v1566 = vmul.f32 %v1484, 1.442695
        %v1567 = vpow.pop %v1566
        %v1568 = vmul.f32 %v1485, 1.442695
        %v1569 = vpow.pop %v1568
        %v1570 = vmul.f32 %v1486, 1.442695
        %v1571 = vpow.pop %v1570
        %v1572 = vmul.f32 %v1487, 1.442695
        %v1573 = vpow.pop %v1572
        %v1574 = vmul.f32 %v1488, 1.442695
        %v1575 = vpow.pop %v1574
        %v1576 = vmul.f32 %v1489, 1.442695
        %v1577 = vpow.pop %v1576
        %v1578 = vmul.f32 %v1490, 1.442695
        %v1579 = vpow.pop %v1578
        %v1580 = vmul.f32 %v1491, 1.442695
        %v1581 = vpow.pop %v1580
        %v1582 = vmul.f32 %v1492, 1.442695
        %v1583 = vpow.pop %v1582
        %v1584 = vmul.f32 %v1493, 1.442695
        %v1585 = vpow.pop %v1584
        %v1586 = vmul.f32 %v1494, 1.442695
        %v1587 = vpow.pop %v1586
        %v1588 = vmul.f32 %v1495, 1.442695
        %v1589 = vpow.pop %v1588
        %v1590 = vmul.f32 %v1496, 1.442695
        %v1591 = vpow.pop %v1590
        %v1592 = vmul.f32 %v1497, 1.442695
        %v1593 = vpow.pop %v1592
        %v1594 = vmul.f32 %v1498, 1.442695
        %v1595 = vpow.pop %v1594
        %v1596 = vmul.f32 %v1499, 1.442695
        %v1597 = vpow.pop %v1596
        %v1598 = vmul.f32 %v1500, 1.442695
        %v1599 = vpow.pop %v1598
        %v1600 = vmul.f32 %v1501, 1.442695
        %v1601 = vpow.pop %v1600
        %v1602 = vmul.f32 %v1502, 1.442695
        %v1603 = vpow.pop %v1602
        %v1604 = vmul.f32 %v1503, 1.442695
        %v1605 = vpow.pop %v1604
        %v1606 = vmul.f32 %v1504, 1.442695
        %v1607 = vpow.pop %v1606
        %v1608 = vmul.f32 %v1505, 1.442695
        %v1609 = vpow.pop %v1608
        %v1610 = vmul.f32 %v1506, 1.442695
        %v1611 = vpow.pop %v1610
        %v1612 = vmul.f32 %v1507, 1.442695
        %v1613 = vpow.pop %v1612
        %v1614 = vmul.f32 %v1508, 1.442695
        %v1615 = vpow.pop %v1614
        %v1616 = vmul.f32 %v1509, 1.442695
        %v1617 = vpow.pop %v1616
        %v1618 = vmul.f32 %v1510, 1.442695
        %v1619 = vpow.pop %v1618
        %v1620 = vmul.f32 %v1511, 1.442695
        %v1621 = vpow.pop %v1620
        %v1622 = vmul.f32 %v1512, 1.442695
        %v1623 = vpow.pop %v1622
        %v1624 = vmul.f32 %v1513, 1.442695
        %v1625 = vpow.pop %v1624
        %v1626 = vmul.f32 %v1514, 1.442695
        %v1627 = vpow.pop %v1626
        %v1628 = vmul.f32 %v1515, 1.442695
        %v1629 = vpow.pop %v1628
        %v1630 = vmul.f32 %v1516, 1.442695
        %v1631 = vpow.pop %v1630
        %v1632 = vmul.f32 %v1517, 1.442695
        %v1633 = vpow.pop %v1632
        %v1634 = vmul.f32 %v1518, 1.442695
        %v1635 = vpow.pop %v1634
        %v1636 = vmul.f32 %v1519, 1.442695
        %v1637 = vpow.pop %v1636
        %v1638 = vmul.f32 %v1520, 1.442695
        %v1639 = vpow.pop %v1638
        %v1640 = vmul.f32 %v1521, 1.442695
        %v1641 = vpow.pop %v1640
        %v1642 = vmul.f32 %v1522, 1.442695
        %v1643 = vpow.pop %v1642
        %v1644 = vmul.f32 %v1523, 1.442695
        %v1645 = vpow.pop %v1644
        %v1646 = vmul.f32 %v1524, 1.442695
        %v1647 = vpow.pop %v1646
        %v1648 = vmul.f32 %v1525, 1.442695
        %v1649 = vpow.pop %v1648
        %v1650 = vmul.f32 %v1526, 1.442695
        %v1651 = vpow.pop %v1650
        %v1652 = vmul.f32 %v1527, 1.442695
        %v1653 = vpow.pop %v1652
        %v1654 = vmul.f32 %v1528, 1.442695
        %v1655 = vpow.pop %v1654
        %v1656 = vmul.f32 %v1529, 1.442695
        %v1657 = vpow.pop %v1656
        %1658 = vmatprep.subr.mxu0 %v1533
        %1659 = vmatpush1.xpose.msra.mxu0 %v1531
        %1660 = vmatprep.subr.mxu0 %v1537
        %1661 = vmatpush1.xpose.msra.mxu0 %v1535
        %1662 = vmatprep.subr.mxu0 %v1541
        %1663 = vmatpush1.xpose.msra.mxu0 %v1539
        %1664 = vmatprep.subr.mxu0 %v1545
        %1665 = vmatpush1.xpose.msra.mxu0 %v1543
        %1666 = vmatprep.subr.mxu0 %v1549
        %1667 = vmatpush1.xpose.msra.mxu0 %v1547
        %1668 = vmatprep.subr.mxu0 %v1553
        %1669 = vmatpush1.xpose.msra.mxu0 %v1551
        %1670 = vmatprep.subr.mxu0 %v1557
        %1671 = vmatpush1.xpose.msra.mxu0 %v1555
        %1672 = vmatprep.subr.mxu0 %v1561
        %1673 = vmatpush1.xpose.msra.mxu0 %v1559
        %1674 = vmatprep.subr.mxu0 %v1565
        %1675 = vmatpush1.xpose.msra.mxu0 %v1563
        %1676 = vmatprep.subr.mxu0 %v1569
        %1677 = vmatpush1.xpose.msra.mxu0 %v1567
        %1678 = vmatprep.subr.mxu0 %v1573
        %1679 = vmatpush1.xpose.msra.mxu0 %v1571
        %1680 = vmatprep.subr.mxu0 %v1577
        %1681 = vmatpush1.xpose.msra.mxu0 %v1575
        %1682 = vmatprep.subr.mxu0 %v1581
        %1683 = vmatpush1.xpose.msra.mxu0 %v1579
        %1684 = vmatprep.subr.mxu0 %v1585
        %1685 = vmatpush1.xpose.msra.mxu0 %v1583
        %1686 = vmatprep.subr.mxu0 %v1589
        %1687 = vmatpush1.xpose.msra.mxu0 %v1587
        %1688 = vmatprep.subr.mxu0 %v1593
        %1689 = vmatpush1.xpose.msra.mxu0 %v1591
        %1690 = vmatprep.subr.mxu0 %v1597
        %1691 = vmatpush1.xpose.msra.mxu0 %v1595
        %1692 = vmatprep.subr.mxu0 %v1601
        %1693 = vmatpush1.xpose.msra.mxu0 %v1599
        %1694 = vmatprep.subr.mxu0 %v1605
        %1695 = vmatpush1.xpose.msra.mxu0 %v1603
        %1696 = vmatprep.subr.mxu0 %v1609
        %1697 = vmatpush1.xpose.msra.mxu0 %v1607
        %1698 = vmatprep.subr.mxu0 %v1613
        %1699 = vmatpush1.xpose.msra.mxu0 %v1611
        %1700 = vmatprep.subr.mxu0 %v1617
        %1701 = vmatpush1.xpose.msra.mxu0 %v1615
        %1702 = vmatprep.subr.mxu0 %v1621
        %1703 = vmatpush1.xpose.msra.mxu0 %v1619
        %1704 = vmatprep.subr.mxu0 %v1625
        %1705 = vmatpush1.xpose.msra.mxu0 %v1623
        %1706 = vmatprep.subr.mxu0 %v1629
        %1707 = vmatpush1.xpose.msra.mxu0 %v1627
        %1708 = vmatprep.subr.mxu0 %v1633
        %1709 = vmatpush1.xpose.msra.mxu0 %v1631
        %1710 = vmatprep.subr.mxu0 %v1637
        %1711 = vmatpush1.xpose.msra.mxu0 %v1635
        %1712 = vmatprep.subr.mxu0 %v1641
        %1713 = vmatpush1.xpose.msra.mxu0 %v1639
        %1714 = vmatprep.subr.mxu0 %v1645
        %1715 = vmatpush1.xpose.msra.mxu0 %v1643
        %1716 = vmatprep.subr.mxu0 %v1649
        %1717 = vmatpush1.xpose.msra.mxu0 %v1647
        %1718 = vmatprep.subr.mxu0 %v1653
        %1719 = vmatpush1.xpose.msra.mxu0 %v1651
        %1720 = vmatprep.subr.mxu0 %v1657
        %1721 = vmatpush1.xpose.msra.mxu0 %v1655
        %1722 = vmatprep.mubr.f32.mxu0 1.0
        %1723 = vmatmul.mubr.f32.gmra.mrb[0].mxu0 1.0
        %v1724 = vpop.f32.mrb[0].mxu0
        %v1725 = vadd.f32 0.0, %v1724
        %v1726 = vpop.f32.mrb[0].mxu0
        %v1727 = vadd.f32 0.0, %v1726
        %1728 = vdwg.mxu0
        %v1729 = vrcp.pop %v1725
        %v1730 = vrcp.pop %v1727
        %v1731 = vmul.f32 %v1725, %v1729
        %v1732 = vmul.f32 %v1727, %v1730
        %v1733 = vsub.f32 2.0, %v1731
        %v1734 = vsub.f32 2.0, %v1732
        %v1735 = vmul.f32 %v1729, %v1733
        %v1736 = vmul.f32 %v1730, %v1734
        %1737 = vmatprep.subr.mxu0 %v1533
        %1738 = vmatpush1.xpose.msra.mxu0 %v1531
        %1739 = vmatprep.subr.mxu0 %v1537
        %1740 = vmatpush1.xpose.msra.mxu0 %v1535
        %1741 = vmatprep.subr.mxu0 %v1541
        %1742 = vmatpush1.xpose.msra.mxu0 %v1539
        %1743 = vmatprep.subr.mxu0 %v1545
        %1744 = vmatpush1.xpose.msra.mxu0 %v1543
        %1745 = vmatprep.subr.mxu0 %v1549
        %1746 = vmatpush1.xpose.msra.mxu0 %v1547
        %1747 = vmatprep.subr.mxu0 %v1553
        %1748 = vmatpush1.xpose.msra.mxu0 %v1551
        %1749 = vmatprep.subr.mxu0 %v1557
        %1750 = vmatpush1.xpose.msra.mxu0 %v1555
        %1751 = vmatprep.subr.mxu0 %v1561
        %1752 = vmatpush1.xpose.msra.mxu0 %v1559
        %1753 = vmatprep.subr.mxu0 %v1565
        %1754 = vmatpush1.xpose.msra.mxu0 %v1563
        %1755 = vmatprep.subr.mxu0 %v1569
        %1756 = vmatpush1.xpose.msra.mxu0 %v1567
        %1757 = vmatprep.subr.mxu0 %v1573
        %1758 = vmatpush1.xpose.msra.mxu0 %v1571
        %1759 = vmatprep.subr.mxu0 %v1577
        %1760 = vmatpush1.xpose.msra.mxu0 %v1575
        %1761 = vmatprep.subr.mxu0 %v1581
        %1762 = vmatpush1.xpose.msra.mxu0 %v1579
        %1763 = vmatprep.subr.mxu0 %v1585
        %1764 = vmatpush1.xpose.msra.mxu0 %v1583
        %1765 = vmatprep.subr.mxu0 %v1589
        %1766 = vmatpush1.xpose.msra.mxu0 %v1587
        %1767 = vmatprep.subr.mxu0 %v1593
        %1768 = vmatpush1.xpose.msra.mxu0 %v1591
        %1769 = vmatprep.subr.mxu0 %v1597
        %1770 = vmatpush1.xpose.msra.mxu0 %v1595
        %1771 = vmatprep.subr.mxu0 %v1601
        %1772 = vmatpush1.xpose.msra.mxu0 %v1599
        %1773 = vmatprep.subr.mxu0 %v1605
        %1774 = vmatpush1.xpose.msra.mxu0 %v1603
        %1775 = vmatprep.subr.mxu0 %v1609
        %1776 = vmatpush1.xpose.msra.mxu0 %v1607
        %1777 = vmatprep.subr.mxu0 %v1613
        %1778 = vmatpush1.xpose.msra.mxu0 %v1611
        %1779 = vmatprep.subr.mxu0 %v1617
        %1780 = vmatpush1.xpose.msra.mxu0 %v1615
        %1781 = vmatprep.subr.mxu0 %v1621
        %1782 = vmatpush1.xpose.msra.mxu0 %v1619
        %1783 = vmatprep.subr.mxu0 %v1625
        %1784 = vmatpush1.xpose.msra.mxu0 %v1623
        %1785 = vmatprep.subr.mxu0 %v1629
        %1786 = vmatpush1.xpose.msra.mxu0 %v1627
        %1787 = vmatprep.subr.mxu0 %v1633
        %1788 = vmatpush1.xpose.msra.mxu0 %v1631
        %1789 = vmatprep.subr.mxu0 %v1637
        %1790 = vmatpush1.xpose.msra.mxu0 %v1635
        %1791 = vmatprep.subr.mxu0 %v1641
        %1792 = vmatpush1.xpose.msra.mxu0 %v1639
        %1793 = vmatprep.subr.mxu0 %v1645
        %1794 = vmatpush1.xpose.msra.mxu0 %v1643
        %1795 = vmatprep.subr.mxu0 %v1649
        %1796 = vmatpush1.xpose.msra.mxu0 %v1647
        %1797 = vmatprep.subr.mxu0 %v1653
        %1798 = vmatpush1.xpose.msra.mxu0 %v1651
        %1799 = vmatprep.subr.mxu0 %v1657
        %1800 = vmatpush1.xpose.msra.mxu0 %v1655
        %1801 = vmatprep.mubr.f32.mxu0 %v1009
        %1802 = vmatmul.mubr.f32.gmra.mrb[0].mxu0 %v1007
        %v1803 = vpop.f32.mrb[0].mxu0
        %v1804 = vadd.f32 0.0, %v1803
        %v1805 = vpop.f32.mrb[0].mxu0
        %v1806 = vadd.f32 0.0, %v1805
        %1807 = vdwg.mxu0
        %v1808 = vlaneseq
        %v1809 = vshrl.u32 %v1808, 7
        %v1810 = vsub.s32 0, %v1809
        %v1811 = vrot.slane %v1735, %v1810
        %v1812 = vlaneseq
        %v1813 = vshrl.u32 %v1812, 7
        %v1814 = vsub.s32 0, %v1813
        %v1815 = vrot.slane %v1736, %v1814
        %v1816 = vmul.f32 %v1804, %v1811
        %v1817 = vmul.f32 %v1806, %v1815
        %v1820 = vcombine.low %v1816, %v1817
        %1822 = vst [vmem:[%s338] sm:$0xff] %v1820
        %s1823 = sand.u32 %s224, 1
        %s1824 = scalar_lea.sflag [#allocation3], %s1823
        %s1825 = sand.u32 %s224, 1
        %s1826 = smul.addr %s1825, 8
        %s1827 = scalar_lea.vmem [#allocation2], %s1826
        // Predicated region
        $region53: #{tpu_custom_call.1} parent=51 // pred_check
          %p1828 = pneg %p234
        $region54: #{tpu_custom_call.1} parent=51 // pred_check_branch
          %1830 = sbr.rel (%p1828) target = $region56
        $region55: #{tpu_custom_call.1} parent=51 // pred_region
          %s1831 = smul.u32 2, %s27
          %s1833 = ssub.s32 128, 128
          %1834 = vsyncadd %s1824, %s1833
          %s1835 = smul.addr %s26, 2
          %s1836 = sadd.s32 %s1831, %s1835
          %s1837 = smul.addr %s1836, 64
          %s1838 = scalar_lea.hbm %s8, %s1837
          %s1840 = sshll.u32 %s1827, 4
          %s1841 = int_to_ptr.vmem [resolvable:$true] %s1840
          %1843 = dma.vmem_to_hbm [thread:$0]  %s1841, 128, %s1838, %s1824
        $region56: #{tpu_custom_call.1} parent=51 // pred_fallthru
          _
      $region52: #{tpu_custom_call.1} parent=5 // pred_fallthru
        _
      %p1844 = scmp.le.s32.totalorder 2, %s17
      // Predicated region
      $region57: #{tpu_custom_call.1} parent=5 // pred_check
        %p1845 = pneg %p1844
      $region58: #{tpu_custom_call.1} parent=5 // pred_check_branch
        %1847 = sbr.rel (%p1845) target = $region60
      $region59: #{tpu_custom_call.1} parent=5 // pred_region
        %s1848 = ssub.s32 %s17, 2
        // Predicated region
        $region61: #{tpu_custom_call.1} parent=59 // pred_check
          %p1849 = pneg %p240
        $region62: #{tpu_custom_call.1} parent=59 // pred_check_branch
          %1851 = sbr.rel (%p1849) target = $region64
        $region63: #{tpu_custom_call.1} parent=59 // pred_region
          %s1852 = sand.u32 %s225, 1
          %s1853 = scalar_lea.sflag [#allocation3], %s1852
          %s1854 = sand.u32 %s225, 1
          %s1855 = smul.addr %s1854, 8
          %s1856 = scalar_lea.vmem [#allocation2], %s1855
          %1857 = dma.done %s1853, 128
        $region64: #{tpu_custom_call.1} parent=59 // pred_fallthru
          _
      $region60: #{tpu_custom_call.1} parent=5 // pred_fallthru
        _
    $region6: #{tpu_custom_call.1} parent=1 // loop_footer
      %s21 = sadd.s32 1, %s17
    $region7: #{tpu_custom_call.1} parent=1 // loop_footer_branch
      %16 = sbr.rel target = $region3
    $region8: #{tpu_custom_call.1} parent=1 // loop_exit
      _
    %1858 = vsyncpa [#allocation3], 1
    %s1859 = scalar_lea.sflag [#allocation3], 1
    %1860 = vsyncpa %s1859, 1

</llo_original>
